<compile_context>
chip_gen: v7x
topology: tpu7x:2x2x1
jax: 0.10.0
libtpu: 0.0.40
codegen_flags: <defaults>
</compile_context>

<pallas_src>
import numpy as np
import jax
import jax.numpy as jnp
from jax.experimental import pallas as pl
from jax.experimental.pallas import tpu as pltpu

CH = 64            # hidden width
IN_CH = 66         # positional-encoding input channels
IN_PAD = 80        # IN_CH zero-padded to a multiple of 16 (bf16 sublane pack)
N_LAYERS = 4       # hidden layers per LinearOutputStack
NEG_SLOPE = 0.2    # LeakyReLU slope used by LinearOutputStack
TWO_PI = 2.0 * np.pi
MAX_TILE_N = 4096  # points per grid step (multiple of 128)


def _lrelu(x):
    # mul+max instead of cmp+mul+select (valid for 0 < slope < 1).
    return jnp.maximum(x, NEG_SLOPE * x)


def _round_up(x, m):
    return ((x + m - 1) // m) * m


def nerf2d_kernel(x_ref, w_in_ref, b_in_ref, w_net_ref, b_net_ref,
                  w_br0_ref, b_br0_ref, w_br_ref, b_br_ref,
                  w_head_ref, b_head_ref, out_ref):
    """One tile of T points. x_ref is (T, IN_PAD); activations are (C, T)."""
    cdt = x_ref.dtype

    def layer(w, b, a):
        y = jnp.dot(w, a, preferred_element_type=jnp.float32) + b
        return _lrelu(y).astype(cdt)

    # --- first trunk layer: contract x's minor (channel) dim in-VMEM so the
    #     wrapper never transposes the (N, 66) input in HBM. ---
    x = x_ref[...]                                            # (T, IN_PAD)
    y0 = jax.lax.dot_general(w_in_ref[...], x,
                             (((1,), (1,)), ((), ())),        # (64,80)x(T,80)^T
                             preferred_element_type=jnp.float32)
    h = _lrelu(y0 + b_in_ref[...]).astype(cdt)                # (64, T)

    # --- trunk: 4 x (64 -> 64), LeakyReLU(0.2) after each ---
    for i in range(N_LAYERS):
        h = layer(w_net_ref[i], b_net_ref[i], h)

    # --- fused mag|phase branch: (64 -> 128), then 3 x block-diag (128->128) ---
    hb = layer(w_br0_ref[...], b_br0_ref[...], h)             # (128, T)
    for i in range(N_LAYERS - 1):
        hb = layer(w_br_ref[i], b_br_ref[i], hb)

    # --- fused head: (128 -> 2); row 0 = mag pre-square, row 1 = phase pre-sin
    head = (jnp.dot(w_head_ref[...], hb, preferred_element_type=jnp.float32)
            + b_head_ref[...].astype(jnp.float32))            # (2, T), f32
    mag = head[0:1, :]
    ph = head[1:2, :]
    # square / sin each computed on their own row only; single lane-dense store.
    out_ref[...] = jnp.concatenate([mag * mag, jnp.sin(ph) * TWO_PI], axis=0)


def pack_params(params, dtype=jnp.bfloat16):
    """Transpose / fuse / pad the raw per-layer params into the kernel layout."""
    (w_in, b_in, w_h, b_h, w_mag, b_mag, w_ph, b_ph) = params
    z = jnp.zeros((CH, CH), jnp.float32)

    # input layer: contraction dim zero-padded 66 -> 80, transposed.
    w_in_t = jnp.pad(w_in, ((0, IN_PAD - IN_CH), (0, 0))).T          # (64, 80)
    b_in_t = b_in.reshape(CH, 1)

    # trunk hidden layers 0..3 (transposed).
    w_net_t = jnp.transpose(w_h[:N_LAYERS], (0, 2, 1))               # (4, 64, 64)
    b_net_t = b_h[:N_LAYERS].reshape(N_LAYERS, CH, 1)

    # fused branch, first layer: [w_mag0 | w_ph0] -> (64, 128), transposed.
    w_br0_t = jnp.concatenate([w_h[N_LAYERS], w_h[2 * N_LAYERS]], axis=1).T
    b_br0_t = jnp.concatenate([b_h[N_LAYERS],
                               b_h[2 * N_LAYERS]]).reshape(2 * CH, 1)

    # fused branch, layers 1..3: block-diagonal (128, 128), transposed.
    w_list, b_list = [], []
    for j in range(1, N_LAYERS):
        wm, wp = w_h[N_LAYERS + j], w_h[2 * N_LAYERS + j]
        blk = jnp.concatenate([jnp.concatenate([wm, z], axis=1),
                               jnp.concatenate([z, wp], axis=1)], axis=0)
        w_list.append(blk.T)
        b_list.append(jnp.concatenate([b_h[N_LAYERS + j],
                                       b_h[2 * N_LAYERS + j]]).reshape(2 * CH, 1))
    w_br_t = jnp.stack(w_list)                                       # (3, 128, 128)
    b_br_t = jnp.stack(b_list)                                       # (3, 128, 1)

    # fused head: row 0 reads the mag half, row 1 the phase half.
    zc = jnp.zeros((CH, 1), jnp.float32)
    w_head_t = jnp.concatenate(
        [jnp.concatenate([w_mag, zc], axis=1),
         jnp.concatenate([zc, w_ph], axis=1)], axis=0).T             # (2, 128)
    b_head_t = jnp.stack([b_mag[0], b_ph[0]]).reshape(2, 1)

    packed = (w_in_t, b_in_t, w_net_t, b_net_t,
              w_br0_t, b_br0_t, w_br_t, b_br_t, w_head_t, b_head_t)
    return tuple(p.astype(dtype) for p in packed)


def nerf2d_forward(pos, conditioning, params, *, compute_dtype=jnp.bfloat16,
                   max_tile_n=MAX_TILE_N):
    """pos: (1, H, W, 66); conditioning: (B, ...). Returns (B, H, W, 2) f32."""
    B = conditioning.shape[0]
    _, H, W, C = pos.shape
    assert C == IN_CH

    packed = pack_params(params, dtype=compute_dtype)

    # conditioning only contributes its batch size -> compute H*W points once.
    n = H * W
    n128 = _round_up(n, 128)
    tile = min(max_tile_n, n128)
    # v7x has two TensorCores: make sure the (parallel) grid axis has >= 2
    # steps whenever there is enough work to split.
    if 256 <= n128 <= 2 * max_tile_n:
        tile = min(tile, _round_up(n128 // 2, 128))
    n_pad = _round_up(n, tile)
    grid = (n_pad // tile,)

    # No HBM transpose: x stays (N, IN_PAD); the kernel contracts the minor dim.
    x = pos.reshape(n, C)
    x = jnp.pad(x, ((0, n_pad - n), (0, IN_PAD - C))).astype(compute_dtype)

    def _const_spec(arr):
        nd = arr.ndim
        # NOTE: pipeline_mode=pl.Buffered(1) would reclaim the duplicate
        # resident-weight buffers (~320 KB) on VMEM-tight chips (v7x); left at
        # the default here since the activation live set is only a few MB.
        return pl.BlockSpec(arr.shape, lambda i, _nd=nd: (0,) * _nd)

    weight_specs = [_const_spec(p) for p in packed]

    out_t = pl.pallas_call(
        nerf2d_kernel,
        out_shape=jax.ShapeDtypeStruct((2, n_pad), jnp.float32),
        grid=grid,
        in_specs=[pl.BlockSpec((tile, IN_PAD), lambda i: (i, 0))] + weight_specs,
        out_specs=pl.BlockSpec((2, tile), lambda i: (0, i)),
        compiler_params=pltpu.CompilerParams(
            dimension_semantics=("parallel",)),
    )(x, *packed)

    out = out_t[:, :n].T.reshape(1, H, W, 2)
    return jnp.broadcast_to(out, (B, H, W, 2))


def nerf2d_reference(pos, conditioning, params, compute_dtype=jnp.float32):
    """Pure-JAX reference; compute_dtype mirrors the kernel's cast points."""
    B = conditioning.shape[0]
    _, H, W, C = pos.shape
    cdt = compute_dtype
    hi = jax.lax.Precision.HIGHEST
    (w_in, b_in, w_h, b_h, w_mag, b_mag, w_ph, b_ph) = params

    def lin(a, w, b):
        return (jnp.dot(a.astype(cdt), w.astype(cdt), precision=hi,
                        preferred_element_type=jnp.float32)
                + b.astype(cdt))

    x = pos.reshape(H * W, C)
    h = _lrelu(lin(x, w_in, b_in)).astype(cdt)
    for i in range(N_LAYERS):
        h = _lrelu(lin(h, w_h[i], b_h[i])).astype(cdt)
    hm = h
    for i in range(N_LAYERS, 2 * N_LAYERS):
        hm = _lrelu(lin(hm, w_h[i], b_h[i])).astype(cdt)
    mag = lin(hm, w_mag, b_mag) ** 2
    hp = h
    for i in range(2 * N_LAYERS, 3 * N_LAYERS):
        hp = _lrelu(lin(hp, w_h[i], b_h[i])).astype(cdt)
    phase = jnp.sin(lin(hp, w_ph, b_ph)) * TWO_PI
    out = jnp.concatenate([mag, phase], axis=-1).astype(jnp.float32)
    out = out.reshape(1, H, W, 2)
    return jnp.broadcast_to(out, (B, H, W, 2))


def init_params(key, std=0.02, bias_std=0.0):
    # TODO(synk): LinearOutputStack / make_initializer sources were not given;
    # assumed structure is input Linear + LeakyReLU(0.2), `layers` hidden
    # Linear+LeakyReLU blocks, optional output Linear; W ~ N(0, std).
    ks = jax.random.split(key, 8)
    w_in = jax.random.normal(ks[0], (IN_CH, CH), jnp.float32) * std
    b_in = jax.random.normal(ks[1], (CH,), jnp.float32) * bias_std
    w_h = jax.random.normal(ks[2], (3 * N_LAYERS, CH, CH), jnp.float32) * std
    b_h = jax.random.normal(ks[3], (3 * N_LAYERS, CH), jnp.float32) * bias_std
    w_mag = jax.random.normal(ks[4], (CH, 1), jnp.float32) * std
    b_mag = jax.random.normal(ks[5], (1,), jnp.float32) * bias_std
    w_ph = jax.random.normal(ks[6], (CH, 1), jnp.float32) * std
    b_ph = jax.random.normal(ks[7], (1,), jnp.float32) * bias_std
    return (w_in, b_in, w_h, b_h, w_mag, b_mag, w_ph, b_ph)


if __name__ == "__main__":
    key = jax.random.PRNGKey(0)
    k_pos, k_cond, k_par = jax.random.split(key, 3)

    # Small shapes: pos (1, 16, 16, 66), conditioning batch = 2.
    H, W, B = 16, 16, 2
    pos = jax.random.normal(k_pos, (1, H, W, IN_CH), jnp.float32)
    conditioning = jax.random.normal(k_cond, (B, 8), jnp.float32)  # only batch dim used

    # std=0.15 keeps activations O(1) through all 13 linear layers so the check
    # actually exercises the whole stack (the module's 0.02 init shrinks every
    # output to ~1e-9, which would make the comparison vacuous).
    params = init_params(k_par, std=0.15, bias_std=0.1)

    # bf16 (default) path, checked against a reference with matching cast points.
    out_bf16 = jax.block_until_ready(nerf2d_forward(pos, conditioning, params))
    ref_bf16 = jax.block_until_ready(
        nerf2d_reference(pos, conditioning, params, compute_dtype=jnp.bfloat16))

    # f32 path as the tight correctness oracle.
    out_f32 = jax.block_until_ready(
        nerf2d_forward(pos, conditioning, params, compute_dtype=jnp.float32))
    ref_f32 = jax.block_until_ready(nerf2d_reference(pos, conditioning, params))

    assert out_bf16.shape == (B, H, W, 2), out_bf16.shape
    assert out_f32.shape == (B, H, W, 2), out_f32.shape
    np.testing.assert_allclose(np.asarray(out_f32), np.asarray(ref_f32),
                               rtol=2e-2, atol=2e-2)
    np.testing.assert_allclose(np.asarray(out_bf16), np.asarray(ref_bf16),
                               rtol=2e-2, atol=2e-2)
    print("KERNEL_OK")
</pallas_src>

<mosaic_0001>
module attributes {stable_mosaic.version = 11 : i64} {
  func.func @nerf2d_kernel(%arg0: i32, %arg1: memref<128x80xbf16, #tpu.memory_space<vmem>>, %arg2: memref<64x80xbf16, #tpu.memory_space<vmem>>, %arg3: memref<64x1xbf16, #tpu.memory_space<vmem>>, %arg4: memref<4x64x64xbf16, #tpu.memory_space<vmem>>, %arg5: memref<4x64x1xbf16, #tpu.memory_space<vmem>>, %arg6: memref<128x64xbf16, #tpu.memory_space<vmem>>, %arg7: memref<128x1xbf16, #tpu.memory_space<vmem>>, %arg8: memref<3x128x128xbf16, #tpu.memory_space<vmem>>, %arg9: memref<3x128x1xbf16, #tpu.memory_space<vmem>>, %arg10: memref<2x128xbf16, #tpu.memory_space<vmem>>, %arg11: memref<2x1xbf16, #tpu.memory_space<vmem>>, %arg12: memref<2x128xf32, #tpu.memory_space<vmem>>) attributes {dimension_semantics = [#tpu.dimension_semantics<parallel>], iteration_bounds = array<i64: 2>, scalar_prefetch = 0 : i64, scratch_operands = 0 : i64, tpu.core_type = #tpu.core_type<tc>, window_params = [{transform_indices = @transform_0, window_bounds = array<i64: 128, 80>}, {pipeline_mode = #tpu.pipeline_mode<synchronous>, transform_indices = @transform_1, window_bounds = array<i64: 64, 80>}, {pipeline_mode = #tpu.pipeline_mode<synchronous>, transform_indices = @transform_2, window_bounds = array<i64: 64, 1>}, {pipeline_mode = #tpu.pipeline_mode<synchronous>, transform_indices = @transform_3, window_bounds = array<i64: 4, 64, 64>}, {pipeline_mode = #tpu.pipeline_mode<synchronous>, transform_indices = @transform_4, window_bounds = array<i64: 4, 64, 1>}, {pipeline_mode = #tpu.pipeline_mode<synchronous>, transform_indices = @transform_5, window_bounds = array<i64: 128, 64>}, {pipeline_mode = #tpu.pipeline_mode<synchronous>, transform_indices = @transform_6, window_bounds = array<i64: 128, 1>}, {pipeline_mode = #tpu.pipeline_mode<synchronous>, transform_indices = @transform_7, window_bounds = array<i64: 3, 128, 128>}, {pipeline_mode = #tpu.pipeline_mode<synchronous>, transform_indices = @transform_8, window_bounds = array<i64: 3, 128, 1>}, {pipeline_mode = #tpu.pipeline_mode<synchronous>, transform_indices = @transform_9, window_bounds = array<i64: 2, 128>}, {pipeline_mode = #tpu.pipeline_mode<synchronous>, transform_indices = @transform_10, window_bounds = array<i64: 2, 1>}, {transform_indices = @transform_11, window_bounds = array<i64: 2, 128>}]} {
    %c0 = arith.constant 0 : index
    %c0_0 = arith.constant 0 : index
    %0 = vector.load %arg1[%c0, %c0_0] : memref<128x80xbf16, #tpu.memory_space<vmem>>, vector<128x80xbf16>
    %c0_1 = arith.constant 0 : index
    %c0_2 = arith.constant 0 : index
    %1 = vector.load %arg2[%c0_1, %c0_2] : memref<64x80xbf16, #tpu.memory_space<vmem>>, vector<64x80xbf16>
    %cst = arith.constant dense<0.000000e+00> : vector<64x128xf32>
    %2 = tpu.matmul %1, %0, %cst {dimension_numbers = #tpu.dot_dimension_numbers<[1], [1], [0], [0], [0, 0, 1, 0], [], []>} : vector<64x80xbf16>, vector<128x80xbf16>, vector<64x128xf32> -> vector<64x128xf32>
    %c0_3 = arith.constant 0 : index
    %c0_4 = arith.constant 0 : index
    %3 = vector.load %arg3[%c0_3, %c0_4] : memref<64x1xbf16, #tpu.memory_space<vmem>>, vector<64x1xbf16>
    %4 = arith.extf %3 : vector<64x1xbf16> to vector<64x1xf32>
    %5 = vector.broadcast %4 : vector<64x1xf32> to vector<64x128xf32>
    %6 = arith.addf %2, %5 : vector<64x128xf32>
    %cst_5 = arith.constant 2.000000e-01 : f32
    %7 = vector.broadcast %cst_5 : f32 to vector<64x128xf32>
    %8 = arith.mulf %7, %6 : vector<64x128xf32>
    %9 = arith.maximumf %6, %8 : vector<64x128xf32>
    %10 = arith.truncf %9 : vector<64x128xf32> to vector<64x128xbf16>
    %c0_6 = arith.constant 0 : index
    %c0_7 = arith.constant 0 : index
    %c0_8 = arith.constant 0 : index
    %11 = vector.load %arg4[%c0_6, %c0_7, %c0_8] : memref<4x64x64xbf16, #tpu.memory_space<vmem>>, vector<1x64x64xbf16>
    %12 = vector.shape_cast %11 : vector<1x64x64xbf16> to vector<64x64xbf16>
    %c0_9 = arith.constant 0 : index
    %c0_10 = arith.constant 0 : index
    %c0_11 = arith.constant 0 : index
    %13 = vector.load %arg5[%c0_9, %c0_10, %c0_11] : memref<4x64x1xbf16, #tpu.memory_space<vmem>>, vector<1x64x1xbf16>
    %14 = vector.shape_cast %13 : vector<1x64x1xbf16> to vector<64x1xbf16>
    %cst_12 = arith.constant dense<0.000000e+00> : vector<64x128xf32>
    %15 = tpu.matmul %12, %10, %cst_12 {dimension_numbers = #tpu.dot_dimension_numbers<[1], [0], [0], [1], [0, 0, 1, 1], [], []>} : vector<64x64xbf16>, vector<64x128xbf16>, vector<64x128xf32> -> vector<64x128xf32>
    %16 = arith.extf %14 : vector<64x1xbf16> to vector<64x1xf32>
    %17 = vector.broadcast %16 : vector<64x1xf32> to vector<64x128xf32>
    %18 = arith.addf %15, %17 : vector<64x128xf32>
    %cst_13 = arith.constant 2.000000e-01 : f32
    %19 = vector.broadcast %cst_13 : f32 to vector<64x128xf32>
    %20 = arith.mulf %19, %18 : vector<64x128xf32>
    %21 = arith.maximumf %18, %20 : vector<64x128xf32>
    %22 = arith.truncf %21 : vector<64x128xf32> to vector<64x128xbf16>
    %c1 = arith.constant 1 : index
    %c0_14 = arith.constant 0 : index
    %c0_15 = arith.constant 0 : index
    %23 = vector.load %arg4[%c1, %c0_14, %c0_15] : memref<4x64x64xbf16, #tpu.memory_space<vmem>>, vector<1x64x64xbf16>
    %24 = vector.shape_cast %23 : vector<1x64x64xbf16> to vector<64x64xbf16>
    %c1_16 = arith.constant 1 : index
    %c0_17 = arith.constant 0 : index
    %c0_18 = arith.constant 0 : index
    %25 = vector.load %arg5[%c1_16, %c0_17, %c0_18] : memref<4x64x1xbf16, #tpu.memory_space<vmem>>, vector<1x64x1xbf16>
    %26 = vector.shape_cast %25 : vector<1x64x1xbf16> to vector<64x1xbf16>
    %cst_19 = arith.constant dense<0.000000e+00> : vector<64x128xf32>
    %27 = tpu.matmul %24, %22, %cst_19 {dimension_numbers = #tpu.dot_dimension_numbers<[1], [0], [0], [1], [0, 0, 1, 1], [], []>} : vector<64x64xbf16>, vector<64x128xbf16>, vector<64x128xf32> -> vector<64x128xf32>
    %28 = arith.extf %26 : vector<64x1xbf16> to vector<64x1xf32>
    %29 = vector.broadcast %28 : vector<64x1xf32> to vector<64x128xf32>
    %30 = arith.addf %27, %29 : vector<64x128xf32>
    %cst_20 = arith.constant 2.000000e-01 : f32
    %31 = vector.broadcast %cst_20 : f32 to vector<64x128xf32>
    %32 = arith.mulf %31, %30 : vector<64x128xf32>
    %33 = arith.maximumf %30, %32 : vector<64x128xf32>
    %34 = arith.truncf %33 : vector<64x128xf32> to vector<64x128xbf16>
    %c2 = arith.constant 2 : index
    %c0_21 = arith.constant 0 : index
    %c0_22 = arith.constant 0 : index
    %35 = vector.load %arg4[%c2, %c0_21, %c0_22] : memref<4x64x64xbf16, #tpu.memory_space<vmem>>, vector<1x64x64xbf16>
    %36 = vector.shape_cast %35 : vector<1x64x64xbf16> to vector<64x64xbf16>
    %c2_23 = arith.constant 2 : index
    %c0_24 = arith.constant 0 : index
    %c0_25 = arith.constant 0 : index
    %37 = vector.load %arg5[%c2_23, %c0_24, %c0_25] : memref<4x64x1xbf16, #tpu.memory_space<vmem>>, vector<1x64x1xbf16>
    %38 = vector.shape_cast %37 : vector<1x64x1xbf16> to vector<64x1xbf16>
    %cst_26 = arith.constant dense<0.000000e+00> : vector<64x128xf32>
    %39 = tpu.matmul %36, %34, %cst_26 {dimension_numbers = #tpu.dot_dimension_numbers<[1], [0], [0], [1], [0, 0, 1, 1], [], []>} : vector<64x64xbf16>, vector<64x128xbf16>, vector<64x128xf32> -> vector<64x128xf32>
    %40 = arith.extf %38 : vector<64x1xbf16> to vector<64x1xf32>
    %41 = vector.broadcast %40 : vector<64x1xf32> to vector<64x128xf32>
    %42 = arith.addf %39, %41 : vector<64x128xf32>
    %cst_27 = arith.constant 2.000000e-01 : f32
    %43 = vector.broadcast %cst_27 : f32 to vector<64x128xf32>
    %44 = arith.mulf %43, %42 : vector<64x128xf32>
    %45 = arith.maximumf %42, %44 : vector<64x128xf32>
    %46 = arith.truncf %45 : vector<64x128xf32> to vector<64x128xbf16>
    %c3 = arith.constant 3 : index
    %c0_28 = arith.constant 0 : index
    %c0_29 = arith.constant 0 : index
    %47 = vector.load %arg4[%c3, %c0_28, %c0_29] : memref<4x64x64xbf16, #tpu.memory_space<vmem>>, vector<1x64x64xbf16>
    %48 = vector.shape_cast %47 : vector<1x64x64xbf16> to vector<64x64xbf16>
    %c3_30 = arith.constant 3 : index
    %c0_31 = arith.constant 0 : index
    %c0_32 = arith.constant 0 : index
    %49 = vector.load %arg5[%c3_30, %c0_31, %c0_32] : memref<4x64x1xbf16, #tpu.memory_space<vmem>>, vector<1x64x1xbf16>
    %50 = vector.shape_cast %49 : vector<1x64x1xbf16> to vector<64x1xbf16>
    %cst_33 = arith.constant dense<0.000000e+00> : vector<64x128xf32>
    %51 = tpu.matmul %48, %46, %cst_33 {dimension_numbers = #tpu.dot_dimension_numbers<[1], [0], [0], [1], [0, 0, 1, 1], [], []>} : vector<64x64xbf16>, vector<64x128xbf16>, vector<64x128xf32> -> vector<64x128xf32>
    %52 = arith.extf %50 : vector<64x1xbf16> to vector<64x1xf32>
    %53 = vector.broadcast %52 : vector<64x1xf32> to vector<64x128xf32>
    %54 = arith.addf %51, %53 : vector<64x128xf32>
    %cst_34 = arith.constant 2.000000e-01 : f32
    %55 = vector.broadcast %cst_34 : f32 to vector<64x128xf32>
    %56 = arith.mulf %55, %54 : vector<64x128xf32>
    %57 = arith.maximumf %54, %56 : vector<64x128xf32>
    %58 = arith.truncf %57 : vector<64x128xf32> to vector<64x128xbf16>
    %c0_35 = arith.constant 0 : index
    %c0_36 = arith.constant 0 : index
    %59 = vector.load %arg6[%c0_35, %c0_36] : memref<128x64xbf16, #tpu.memory_space<vmem>>, vector<128x64xbf16>
    %c0_37 = arith.constant 0 : index
    %c0_38 = arith.constant 0 : index
    %60 = vector.load %arg7[%c0_37, %c0_38] : memref<128x1xbf16, #tpu.memory_space<vmem>>, vector<128x1xbf16>
    %cst_39 = arith.constant dense<0.000000e+00> : vector<128x128xf32>
    %61 = tpu.matmul %59, %58, %cst_39 {dimension_numbers = #tpu.dot_dimension_numbers<[1], [0], [0], [1], [0, 0, 1, 1], [], []>} : vector<128x64xbf16>, vector<64x128xbf16>, vector<128x128xf32> -> vector<128x128xf32>
    %62 = arith.extf %60 : vector<128x1xbf16> to vector<128x1xf32>
    %63 = vector.broadcast %62 : vector<128x1xf32> to vector<128x128xf32>
    %64 = arith.addf %61, %63 : vector<128x128xf32>
    %cst_40 = arith.constant 2.000000e-01 : f32
    %65 = vector.broadcast %cst_40 : f32 to vector<128x128xf32>
    %66 = arith.mulf %65, %64 : vector<128x128xf32>
    %67 = arith.maximumf %64, %66 : vector<128x128xf32>
    %68 = arith.truncf %67 : vector<128x128xf32> to vector<128x128xbf16>
    %c0_41 = arith.constant 0 : index
    %c0_42 = arith.constant 0 : index
    %c0_43 = arith.constant 0 : index
    %69 = vector.load %arg8[%c0_41, %c0_42, %c0_43] : memref<3x128x128xbf16, #tpu.memory_space<vmem>>, vector<1x128x128xbf16>
    %70 = vector.shape_cast %69 : vector<1x128x128xbf16> to vector<128x128xbf16>
    %c0_44 = arith.constant 0 : index
    %c0_45 = arith.constant 0 : index
    %c0_46 = arith.constant 0 : index
    %71 = vector.load %arg9[%c0_44, %c0_45, %c0_46] : memref<3x128x1xbf16, #tpu.memory_space<vmem>>, vector<1x128x1xbf16>
    %72 = vector.shape_cast %71 : vector<1x128x1xbf16> to vector<128x1xbf16>
    %cst_47 = arith.constant dense<0.000000e+00> : vector<128x128xf32>
    %73 = tpu.matmul %70, %68, %cst_47 {dimension_numbers = #tpu.dot_dimension_numbers<[1], [0], [0], [1], [0, 0, 1, 1], [], []>} : vector<128x128xbf16>, vector<128x128xbf16>, vector<128x128xf32> -> vector<128x128xf32>
    %74 = arith.extf %72 : vector<128x1xbf16> to vector<128x1xf32>
    %75 = vector.broadcast %74 : vector<128x1xf32> to vector<128x128xf32>
    %76 = arith.addf %73, %75 : vector<128x128xf32>
    %cst_48 = arith.constant 2.000000e-01 : f32
    %77 = vector.broadcast %cst_48 : f32 to vector<128x128xf32>
    %78 = arith.mulf %77, %76 : vector<128x128xf32>
    %79 = arith.maximumf %76, %78 : vector<128x128xf32>
    %80 = arith.truncf %79 : vector<128x128xf32> to vector<128x128xbf16>
    %c1_49 = arith.constant 1 : index
    %c0_50 = arith.constant 0 : index
    %c0_51 = arith.constant 0 : index
    %81 = vector.load %arg8[%c1_49, %c0_50, %c0_51] : memref<3x128x128xbf16, #tpu.memory_space<vmem>>, vector<1x128x128xbf16>
    %82 = vector.shape_cast %81 : vector<1x128x128xbf16> to vector<128x128xbf16>
    %c1_52 = arith.constant 1 : index
    %c0_53 = arith.constant 0 : index
    %c0_54 = arith.constant 0 : index
    %83 = vector.load %arg9[%c1_52, %c0_53, %c0_54] : memref<3x128x1xbf16, #tpu.memory_space<vmem>>, vector<1x128x1xbf16>
    %84 = vector.shape_cast %83 : vector<1x128x1xbf16> to vector<128x1xbf16>
    %cst_55 = arith.constant dense<0.000000e+00> : vector<128x128xf32>
    %85 = tpu.matmul %82, %80, %cst_55 {dimension_numbers = #tpu.dot_dimension_numbers<[1], [0], [0], [1], [0, 0, 1, 1], [], []>} : vector<128x128xbf16>, vector<128x128xbf16>, vector<128x128xf32> -> vector<128x128xf32>
    %86 = arith.extf %84 : vector<128x1xbf16> to vector<128x1xf32>
    %87 = vector.broadcast %86 : vector<128x1xf32> to vector<128x128xf32>
    %88 = arith.addf %85, %87 : vector<128x128xf32>
    %cst_56 = arith.constant 2.000000e-01 : f32
    %89 = vector.broadcast %cst_56 : f32 to vector<128x128xf32>
    %90 = arith.mulf %89, %88 : vector<128x128xf32>
    %91 = arith.maximumf %88, %90 : vector<128x128xf32>
    %92 = arith.truncf %91 : vector<128x128xf32> to vector<128x128xbf16>
    %c2_57 = arith.constant 2 : index
    %c0_58 = arith.constant 0 : index
    %c0_59 = arith.constant 0 : index
    %93 = vector.load %arg8[%c2_57, %c0_58, %c0_59] : memref<3x128x128xbf16, #tpu.memory_space<vmem>>, vector<1x128x128xbf16>
    %94 = vector.shape_cast %93 : vector<1x128x128xbf16> to vector<128x128xbf16>
    %c2_60 = arith.constant 2 : index
    %c0_61 = arith.constant 0 : index
    %c0_62 = arith.constant 0 : index
    %95 = vector.load %arg9[%c2_60, %c0_61, %c0_62] : memref<3x128x1xbf16, #tpu.memory_space<vmem>>, vector<1x128x1xbf16>
    %96 = vector.shape_cast %95 : vector<1x128x1xbf16> to vector<128x1xbf16>
    %cst_63 = arith.constant dense<0.000000e+00> : vector<128x128xf32>
    %97 = tpu.matmul %94, %92, %cst_63 {dimension_numbers = #tpu.dot_dimension_numbers<[1], [0], [0], [1], [0, 0, 1, 1], [], []>} : vector<128x128xbf16>, vector<128x128xbf16>, vector<128x128xf32> -> vector<128x128xf32>
    %98 = arith.extf %96 : vector<128x1xbf16> to vector<128x1xf32>
    %99 = vector.broadcast %98 : vector<128x1xf32> to vector<128x128xf32>
    %100 = arith.addf %97, %99 : vector<128x128xf32>
    %cst_64 = arith.constant 2.000000e-01 : f32
    %101 = vector.broadcast %cst_64 : f32 to vector<128x128xf32>
    %102 = arith.mulf %101, %100 : vector<128x128xf32>
    %103 = arith.maximumf %100, %102 : vector<128x128xf32>
    %104 = arith.truncf %103 : vector<128x128xf32> to vector<128x128xbf16>
    %c0_65 = arith.constant 0 : index
    %c0_66 = arith.constant 0 : index
    %105 = vector.load %arg10[%c0_65, %c0_66] : memref<2x128xbf16, #tpu.memory_space<vmem>>, vector<2x128xbf16>
    %cst_67 = arith.constant dense<0.000000e+00> : vector<2x128xf32>
    %106 = tpu.matmul %105, %104, %cst_67 {dimension_numbers = #tpu.dot_dimension_numbers<[1], [0], [0], [1], [0, 0, 1, 1], [], []>} : vector<2x128xbf16>, vector<128x128xbf16>, vector<2x128xf32> -> vector<2x128xf32>
    %c0_68 = arith.constant 0 : index
    %c0_69 = arith.constant 0 : index
    %107 = vector.load %arg11[%c0_68, %c0_69] : memref<2x1xbf16, #tpu.memory_space<vmem>>, vector<2x1xbf16>
    %108 = arith.extf %107 : vector<2x1xbf16> to vector<2x1xf32>
    %109 = vector.broadcast %108 : vector<2x1xf32> to vector<2x128xf32>
    %110 = arith.addf %106, %109 : vector<2x128xf32>
    %111 = vector.extract_strided_slice %110 {offsets = [0, 0], sizes = [1, 128], strides = [1, 1]} : vector<2x128xf32> to vector<1x128xf32>
    %112 = vector.extract_strided_slice %110 {offsets = [1, 0], sizes = [1, 128], strides = [1, 1]} : vector<2x128xf32> to vector<1x128xf32>
    %113 = arith.mulf %111, %111 : vector<1x128xf32>
    %114 = math.sin %112 : vector<1x128xf32>
    %cst_70 = arith.constant 6.28318548 : f32
    %115 = vector.broadcast %cst_70 : f32 to vector<1x128xf32>
    %116 = arith.mulf %114, %115 : vector<1x128xf32>
    %117 = tpu.concatenate %113, %116 in 0 : vector<1x128xf32>, vector<1x128xf32> -> vector<2x128xf32>
    %c0_71 = arith.constant 0 : index
    %c0_72 = arith.constant 0 : index
    %118 = vector.load %arg12[%c0_71, %c0_72] : memref<2x128xf32, #tpu.memory_space<vmem>>, vector<2x128xf32>
    tpu.vector_store %arg12[%c0_71, %c0_72], %117 {strides = array<i32>} : memref<2x128xf32, #tpu.memory_space<vmem>>, vector<2x128xf32>,
    return
  }
  func.func @transform_0(%arg0: i32) -> (i32, i32) {
    %c0_i32 = arith.constant 0 : i32
    %c0_i32_0 = arith.constant 0 : i32
    return %arg0, %c0_i32 : i32, i32
  }
  func.func @transform_1(%arg0: i32) -> (i32, i32) {
    %c0_i32 = arith.constant 0 : i32
    %c0_i32_0 = arith.constant 0 : i32
    %c0_i32_1 = arith.constant 0 : i32
    return %c0_i32, %c0_i32_0 : i32, i32
  }
  func.func @transform_2(%arg0: i32) -> (i32, i32) {
    %c0_i32 = arith.constant 0 : i32
    %c0_i32_0 = arith.constant 0 : i32
    %c0_i32_1 = arith.constant 0 : i32
    return %c0_i32, %c0_i32_0 : i32, i32
  }
  func.func @transform_3(%arg0: i32) -> (i32, i32, i32) {
    %c0_i32 = arith.constant 0 : i32
    %c0_i32_0 = arith.constant 0 : i32
    %c0_i32_1 = arith.constant 0 : i32
    %c0_i32_2 = arith.constant 0 : i32
    return %c0_i32, %c0_i32_0, %c0_i32_1 : i32, i32, i32
  }
  func.func @transform_4(%arg0: i32) -> (i32, i32, i32) {
    %c0_i32 = arith.constant 0 : i32
    %c0_i32_0 = arith.constant 0 : i32
    %c0_i32_1 = arith.constant 0 : i32
    %c0_i32_2 = arith.constant 0 : i32
    return %c0_i32, %c0_i32_0, %c0_i32_1 : i32, i32, i32
  }
  func.func @transform_5(%arg0: i32) -> (i32, i32) {
    %c0_i32 = arith.constant 0 : i32
    %c0_i32_0 = arith.constant 0 : i32
    %c0_i32_1 = arith.constant 0 : i32
    return %c0_i32, %c0_i32_0 : i32, i32
  }
  func.func @transform_6(%arg0: i32) -> (i32, i32) {
    %c0_i32 = arith.constant 0 : i32
    %c0_i32_0 = arith.constant 0 : i32
    %c0_i32_1 = arith.constant 0 : i32
    return %c0_i32, %c0_i32_0 : i32, i32
  }
  func.func @transform_7(%arg0: i32) -> (i32, i32, i32) {
    %c0_i32 = arith.constant 0 : i32
    %c0_i32_0 = arith.constant 0 : i32
    %c0_i32_1 = arith.constant 0 : i32
    %c0_i32_2 = arith.constant 0 : i32
    return %c0_i32, %c0_i32_0, %c0_i32_1 : i32, i32, i32
  }
  func.func @transform_8(%arg0: i32) -> (i32, i32, i32) {
    %c0_i32 = arith.constant 0 : i32
    %c0_i32_0 = arith.constant 0 : i32
    %c0_i32_1 = arith.constant 0 : i32
    %c0_i32_2 = arith.constant 0 : i32
    return %c0_i32, %c0_i32_0, %c0_i32_1 : i32, i32, i32
  }
  func.func @transform_9(%arg0: i32) -> (i32, i32) {
    %c0_i32 = arith.constant 0 : i32
    %c0_i32_0 = arith.constant 0 : i32
    %c0_i32_1 = arith.constant 0 : i32
    return %c0_i32, %c0_i32_0 : i32, i32
  }
  func.func @transform_10(%arg0: i32) -> (i32, i32) {
    %c0_i32 = arith.constant 0 : i32
    %c0_i32_0 = arith.constant 0 : i32
    %c0_i32_1 = arith.constant 0 : i32
    return %c0_i32, %c0_i32_0 : i32, i32
  }
  func.func @transform_11(%arg0: i32) -> (i32, i32) {
    %c0_i32 = arith.constant 0 : i32
    %c0_i32_0 = arith.constant 0 : i32
    return %c0_i32, %arg0 : i32, i32
  }
}

</mosaic_0001>

<llo_original>
// kernel: tpu_custom_call.1
$region0: #{tpu_custom_call.1}
  #allocation0 [shape = 'u32[]', space=smem, size = 0x4, offset = 0x4, fixed_abs, tag = 'smem constant byte address 0x4 - core index']
  #allocation1 [shape = 'u32[144,128]{1,0:T(1,128)}', space=vmem, size = 0x12000, scoped, tag = 'internal scratch']
  %s0 = inlined_call_operand.vmem [shape: bf16[256,80], index: 0, kind: input, shape index: {}]
  %s1 = inlined_call_operand.vmem [shape: bf16[64,80], index: 1, kind: input, shape index: {}]
  %s2 = inlined_call_operand.vmem [shape: bf16[64,1], index: 2, kind: input, shape index: {}]
  %s3 = inlined_call_operand.vmem [shape: bf16[4,64,64], index: 3, kind: input, shape index: {}]
  %s4 = inlined_call_operand.vmem [shape: bf16[4,64,1], index: 4, kind: input, shape index: {}]
  %s5 = inlined_call_operand.vmem [shape: bf16[128,64], index: 5, kind: input, shape index: {}]
  %s6 = inlined_call_operand.vmem [shape: bf16[128,1], index: 6, kind: input, shape index: {}]
  %s7 = inlined_call_operand.vmem [shape: bf16[3,128,128], index: 7, kind: input, shape index: {}]
  %s8 = inlined_call_operand.vmem [shape: bf16[3,128,1], index: 8, kind: input, shape index: {}]
  %s9 = inlined_call_operand.vmem [shape: bf16[2,128], index: 9, kind: input, shape index: {}]
  %s10 = inlined_call_operand.vmem [shape: bf16[2,1], index: 10, kind: input, shape index: {}]
  %s11 = inlined_call_operand.hbm [shape: f32[2,256], index: 11, kind: output, shape index: {}]
  %s12 = sld [smem:[#allocation0]]
  $region77: #{tpu_custom_call.1} parent=0
    _
  %s14 = ssub.s32 1, %s12
  %s15 = scalar_select 0, %s14, %s12
  $region1: #{tpu_custom_call.1} parent=0
    #allocation2 [shape = 'u8[2048]{0}', space=vmem, size = 0x800, scoped, tag = 'output window, operand 0']
    #allocation3 [shape = 's32[2]{0}', space=sflag, size = 0x8, scoped, tag = 'scoped memory for tpu_custom_call.1']
    %16 = vsyncpa [#allocation3], 0
    %s17 = scalar_lea.sflag [#allocation3], 1
    %18 = vsyncpa %s17, 0
    loop: start=0, step=1, limit=4
    $region2: #{tpu_custom_call.1} parent=1 // loop_pre_header
      _
    $region3: #{tpu_custom_call.1} parent=1 // loop_header
      %s20 = sphi 0, %s24
      %p21 = scmp.ge.s32.totalorder %s20, 4
      %s30 = sphi 0, %s32
      %s33 = sphi 0, %s30
      %s34 = sphi 0, %s33
      %s50 = sphi 0, %s34
      %s54 = sphi 0, %s54
      %s56 = sphi 0, %s54
      %s57 = sphi 0, %s56
      %s71 = sphi 0, %s57
      %s75 = sphi 0, %s75
      %s77 = sphi 0, %s75
      %s78 = sphi 0, %s77
      %s92 = sphi 0, %s78
      %s96 = sphi 0, %s96
      %s98 = sphi 0, %s96
      %s99 = sphi 0, %s98
      %s113 = sphi 0, %s99
      %s117 = sphi 0, %s117
      %s119 = sphi 0, %s117
      %s120 = sphi 0, %s119
      %s134 = sphi 0, %s120
      %s138 = sphi 0, %s138
      %s140 = sphi 0, %s138
      %s141 = sphi 0, %s140
      %s155 = sphi 0, %s141
      %s159 = sphi 0, %s159
      %s161 = sphi 0, %s159
      %s162 = sphi 0, %s161
      %s176 = sphi 0, %s162
      %s180 = sphi 0, %s180
      %s182 = sphi 0, %s180
      %s183 = sphi 0, %s182
      %s197 = sphi 0, %s183
      %s201 = sphi 0, %s201
      %s203 = sphi 0, %s201
      %s204 = sphi 0, %s203
      %s218 = sphi 0, %s204
      %s222 = sphi 0, %s222
      %s224 = sphi 0, %s222
      %s225 = sphi 0, %s224
      %s239 = sphi 0, %s225
      %s243 = sphi 0, %s243
      %s245 = sphi 0, %s243
      %s246 = sphi 0, %s245
      %s260 = sphi 0, %s246
      %s266 = sphi 0, %s268
      %s269 = sphi 0, %s266
      %s270 = sphi 0, %s269
      %s286 = sphi 0, %s270
    $region4: #{tpu_custom_call.1} parent=1 // loop_header_branch
      %23 = sbr.rel (%p21) target = $region8
    $region5: #{tpu_custom_call.1} parent=1 // loop_body
      %s25 = ssub.s32 %s20, 1
      %s26 = ssub.s32 %s20, 2
      %s27 = sadd.s32 %s20, 1
      %s28 = ssub.s32 %s20, %s27
      %p29 = scmp.eq.s32.totalorder %s28, 0
      %s31 = sadd.s32 %s30, 1
      %s32 = scalar_select %p29, %s30, %s31
      %p35 = pneg %p29
      %p36 = scmp.eq.s32.totalorder %s20, 1
      %p37 = por %p35, %p36
      %p38 = scmp.ne.s32.totalorder %s30, %s33
      %p39 = scmp.eq.s32.totalorder %s20, 0
      %p40 = por %p38, %p39
      %p41 = scmp.ne.s32.totalorder %s30, %s33
      %p42 = scmp.eq.s32.totalorder %s25, 1
      %p43 = por %p41, %p42
      %p44 = scmp.ne.s32.totalorder %s33, %s34
      %p45 = scmp.eq.s32.totalorder %s25, 0
      %p46 = por %p44, %p45
      %p47 = scmp.ne.s32.totalorder %s33, %s34
      %p48 = scmp.eq.s32.totalorder %s26, 1
      %p49 = por %p47, %p48
      %p51 = scmp.ne.s32.totalorder %s34, %s50
      %p52 = scmp.eq.s32.totalorder %s26, 0
      %p53 = por %p51, %p52
      %s55 = sadd.s32 %s54, 1
      %p58 = scmp.eq.s32.totalorder %s20, 1
      %p59 = scmp.ne.s32.totalorder %s54, %s56
      %p60 = scmp.eq.s32.totalorder %s20, 0
      %p61 = por %p59, %p60
      %p62 = scmp.ne.s32.totalorder %s54, %s56
      %p63 = scmp.eq.s32.totalorder %s25, 1
      %p64 = por %p62, %p63
      %p65 = scmp.ne.s32.totalorder %s56, %s57
      %p66 = scmp.eq.s32.totalorder %s25, 0
      %p67 = por %p65, %p66
      %p68 = scmp.ne.s32.totalorder %s56, %s57
      %p69 = scmp.eq.s32.totalorder %s26, 1
      %p70 = por %p68, %p69
      %p72 = scmp.ne.s32.totalorder %s57, %s71
      %p73 = scmp.eq.s32.totalorder %s26, 0
      %p74 = por %p72, %p73
      %s76 = sadd.s32 %s75, 1
      %p79 = scmp.eq.s32.totalorder %s20, 1
      %p80 = scmp.ne.s32.totalorder %s75, %s77
      %p81 = scmp.eq.s32.totalorder %s20, 0
      %p82 = por %p80, %p81
      %p83 = scmp.ne.s32.totalorder %s75, %s77
      %p84 = scmp.eq.s32.totalorder %s25, 1
      %p85 = por %p83, %p84
      %p86 = scmp.ne.s32.totalorder %s77, %s78
      %p87 = scmp.eq.s32.totalorder %s25, 0
      %p88 = por %p86, %p87
      %p89 = scmp.ne.s32.totalorder %s77, %s78
      %p90 = scmp.eq.s32.totalorder %s26, 1
      %p91 = por %p89, %p90
      %p93 = scmp.ne.s32.totalorder %s78, %s92
      %p94 = scmp.eq.s32.totalorder %s26, 0
      %p95 = por %p93, %p94
      %s97 = sadd.s32 %s96, 1
      %p100 = scmp.eq.s32.totalorder %s20, 1
      %p101 = scmp.ne.s32.totalorder %s96, %s98
      %p102 = scmp.eq.s32.totalorder %s20, 0
      %p103 = por %p101, %p102
      %p104 = scmp.ne.s32.totalorder %s96, %s98
      %p105 = scmp.eq.s32.totalorder %s25, 1
      %p106 = por %p104, %p105
      %p107 = scmp.ne.s32.totalorder %s98, %s99
      %p108 = scmp.eq.s32.totalorder %s25, 0
      %p109 = por %p107, %p108
      %p110 = scmp.ne.s32.totalorder %s98, %s99
      %p111 = scmp.eq.s32.totalorder %s26, 1
      %p112 = por %p110, %p111
      %p114 = scmp.ne.s32.totalorder %s99, %s113
      %p115 = scmp.eq.s32.totalorder %s26, 0
      %p116 = por %p114, %p115
      %s118 = sadd.s32 %s117, 1
      %p121 = scmp.eq.s32.totalorder %s20, 1
      %p122 = scmp.ne.s32.totalorder %s117, %s119
      %p123 = scmp.eq.s32.totalorder %s20, 0
      %p124 = por %p122, %p123
      %p125 = scmp.ne.s32.totalorder %s117, %s119
      %p126 = scmp.eq.s32.totalorder %s25, 1
      %p127 = por %p125, %p126
      %p128 = scmp.ne.s32.totalorder %s119, %s120
      %p129 = scmp.eq.s32.totalorder %s25, 0
      %p130 = por %p128, %p129
      %p131 = scmp.ne.s32.totalorder %s119, %s120
      %p132 = scmp.eq.s32.totalorder %s26, 1
      %p133 = por %p131, %p132
      %p135 = scmp.ne.s32.totalorder %s120, %s134
      %p136 = scmp.eq.s32.totalorder %s26, 0
      %p137 = por %p135, %p136
      %s139 = sadd.s32 %s138, 1
      %p142 = scmp.eq.s32.totalorder %s20, 1
      %p143 = scmp.ne.s32.totalorder %s138, %s140
      %p144 = scmp.eq.s32.totalorder %s20, 0
      %p145 = por %p143, %p144
      %p146 = scmp.ne.s32.totalorder %s138, %s140
      %p147 = scmp.eq.s32.totalorder %s25, 1
      %p148 = por %p146, %p147
      %p149 = scmp.ne.s32.totalorder %s140, %s141
      %p150 = scmp.eq.s32.totalorder %s25, 0
      %p151 = por %p149, %p150
      %p152 = scmp.ne.s32.totalorder %s140, %s141
      %p153 = scmp.eq.s32.totalorder %s26, 1
      %p154 = por %p152, %p153
      %p156 = scmp.ne.s32.totalorder %s141, %s155
      %p157 = scmp.eq.s32.totalorder %s26, 0
      %p158 = por %p156, %p157
      %s160 = sadd.s32 %s159, 1
      %p163 = scmp.eq.s32.totalorder %s20, 1
      %p164 = scmp.ne.s32.totalorder %s159, %s161
      %p165 = scmp.eq.s32.totalorder %s20, 0
      %p166 = por %p164, %p165
      %p167 = scmp.ne.s32.totalorder %s159, %s161
      %p168 = scmp.eq.s32.totalorder %s25, 1
      %p169 = por %p167, %p168
      %p170 = scmp.ne.s32.totalorder %s161, %s162
      %p171 = scmp.eq.s32.totalorder %s25, 0
      %p172 = por %p170, %p171
      %p173 = scmp.ne.s32.totalorder %s161, %s162
      %p174 = scmp.eq.s32.totalorder %s26, 1
      %p175 = por %p173, %p174
      %p177 = scmp.ne.s32.totalorder %s162, %s176
      %p178 = scmp.eq.s32.totalorder %s26, 0
      %p179 = por %p177, %p178
      %s181 = sadd.s32 %s180, 1
      %p184 = scmp.eq.s32.totalorder %s20, 1
      %p185 = scmp.ne.s32.totalorder %s180, %s182
      %p186 = scmp.eq.s32.totalorder %s20, 0
      %p187 = por %p185, %p186
      %p188 = scmp.ne.s32.totalorder %s180, %s182
      %p189 = scmp.eq.s32.totalorder %s25, 1
      %p190 = por %p188, %p189
      %p191 = scmp.ne.s32.totalorder %s182, %s183
      %p192 = scmp.eq.s32.totalorder %s25, 0
      %p193 = por %p191, %p192
      %p194 = scmp.ne.s32.totalorder %s182, %s183
      %p195 = scmp.eq.s32.totalorder %s26, 1
      %p196 = por %p194, %p195
      %p198 = scmp.ne.s32.totalorder %s183, %s197
      %p199 = scmp.eq.s32.totalorder %s26, 0
      %p200 = por %p198, %p199
      %s202 = sadd.s32 %s201, 1
      %p205 = scmp.eq.s32.totalorder %s20, 1
      %p206 = scmp.ne.s32.totalorder %s201, %s203
      %p207 = scmp.eq.s32.totalorder %s20, 0
      %p208 = por %p206, %p207
      %p209 = scmp.ne.s32.totalorder %s201, %s203
      %p210 = scmp.eq.s32.totalorder %s25, 1
      %p211 = por %p209, %p210
      %p212 = scmp.ne.s32.totalorder %s203, %s204
      %p213 = scmp.eq.s32.totalorder %s25, 0
      %p214 = por %p212, %p213
      %p215 = scmp.ne.s32.totalorder %s203, %s204
      %p216 = scmp.eq.s32.totalorder %s26, 1
      %p217 = por %p215, %p216
      %p219 = scmp.ne.s32.totalorder %s204, %s218
      %p220 = scmp.eq.s32.totalorder %s26, 0
      %p221 = por %p219, %p220
      %s223 = sadd.s32 %s222, 1
      %p226 = scmp.eq.s32.totalorder %s20, 1
      %p227 = scmp.ne.s32.totalorder %s222, %s224
      %p228 = scmp.eq.s32.totalorder %s20, 0
      %p229 = por %p227, %p228
      %p230 = scmp.ne.s32.totalorder %s222, %s224
      %p231 = scmp.eq.s32.totalorder %s25, 1
      %p232 = por %p230, %p231
      %p233 = scmp.ne.s32.totalorder %s224, %s225
      %p234 = scmp.eq.s32.totalorder %s25, 0
      %p235 = por %p233, %p234
      %p236 = scmp.ne.s32.totalorder %s224, %s225
      %p237 = scmp.eq.s32.totalorder %s26, 1
      %p238 = por %p236, %p237
      %p240 = scmp.ne.s32.totalorder %s225, %s239
      %p241 = scmp.eq.s32.totalorder %s26, 0
      %p242 = por %p240, %p241
      %s244 = sadd.s32 %s243, 1
      %p247 = scmp.eq.s32.totalorder %s20, 1
      %p248 = scmp.ne.s32.totalorder %s243, %s245
      %p249 = scmp.eq.s32.totalorder %s20, 0
      %p250 = por %p248, %p249
      %p251 = scmp.ne.s32.totalorder %s243, %s245
      %p252 = scmp.eq.s32.totalorder %s25, 1
      %p253 = por %p251, %p252
      %p254 = scmp.ne.s32.totalorder %s245, %s246
      %p255 = scmp.eq.s32.totalorder %s25, 0
      %p256 = por %p254, %p255
      %p257 = scmp.ne.s32.totalorder %s245, %s246
      %p258 = scmp.eq.s32.totalorder %s26, 1
      %p259 = por %p257, %p258
      %p261 = scmp.ne.s32.totalorder %s246, %s260
      %p262 = scmp.eq.s32.totalorder %s26, 0
      %p263 = por %p261, %p262
      %s264 = ssub.s32 %s20, %s27
      %p265 = scmp.eq.s32.totalorder %s264, 0
      %s267 = sadd.s32 %s266, 1
      %s268 = scalar_select %p265, %s266, %s267
      %p271 = pneg %p265
      %p272 = scmp.eq.s32.totalorder %s20, 1
      %p273 = por %p271, %p272
      %p274 = scmp.ne.s32.totalorder %s266, %s269
      %p275 = scmp.eq.s32.totalorder %s20, 0
      %p276 = por %p274, %p275
      %p277 = scmp.ne.s32.totalorder %s266, %s269
      %p278 = scmp.eq.s32.totalorder %s25, 1
      %p279 = por %p277, %p278
      %p280 = scmp.ne.s32.totalorder %s269, %s270
      %p281 = scmp.eq.s32.totalorder %s25, 0
      %p282 = por %p280, %p281
      %p283 = scmp.ne.s32.totalorder %s269, %s270
      %p284 = scmp.eq.s32.totalorder %s26, 1
      %p285 = por %p283, %p284
      %p287 = scmp.ne.s32.totalorder %s270, %s286
      %p288 = scmp.eq.s32.totalorder %s26, 0
      %p289 = por %p287, %p288
      %p290 = scmp.le.s32.totalorder 1, %s20
      %p291 = scmp.lt.s32.totalorder %s20, 3
      %p292 = pnand %p290, %p291
      %p293 = pneg %p292
      // Predicated region
      $region9: #{tpu_custom_call.1} parent=5 // pred_check
        _
      $region10: #{tpu_custom_call.1} parent=5 // pred_check_branch
        %295 = sbr.rel (%p292) target = $region12
      $region11: #{tpu_custom_call.1} parent=5 // pred_region
        %s296 = ssub.s32 %s20, 1
        // Predicated region
        $region13: #{tpu_custom_call.1} parent=11 // pred_check
          %p297 = pneg %p67
        $region14: #{tpu_custom_call.1} parent=11 // pred_check_branch
          %299 = sbr.rel (%p297) target = $region16
        $region15: #{tpu_custom_call.1} parent=11 // pred_region
          _
        $region16: #{tpu_custom_call.1} parent=11 // pred_fallthru
          _
        // Predicated region
        $region17: #{tpu_custom_call.1} parent=11 // pred_check
          %p300 = pneg %p88
        $region18: #{tpu_custom_call.1} parent=11 // pred_check_branch
          %302 = sbr.rel (%p300) target = $region20
        $region19: #{tpu_custom_call.1} parent=11 // pred_region
          _
        $region20: #{tpu_custom_call.1} parent=11 // pred_fallthru
          _
        // Predicated region
        $region21: #{tpu_custom_call.1} parent=11 // pred_check
          %p303 = pneg %p109
        $region22: #{tpu_custom_call.1} parent=11 // pred_check_branch
          %305 = sbr.rel (%p303) target = $region24
        $region23: #{tpu_custom_call.1} parent=11 // pred_region
          _
        $region24: #{tpu_custom_call.1} parent=11 // pred_fallthru
          _
        // Predicated region
        $region25: #{tpu_custom_call.1} parent=11 // pred_check
          %p306 = pneg %p130
        $region26: #{tpu_custom_call.1} parent=11 // pred_check_branch
          %308 = sbr.rel (%p306) target = $region28
        $region27: #{tpu_custom_call.1} parent=11 // pred_region
          _
        $region28: #{tpu_custom_call.1} parent=11 // pred_fallthru
          _
        // Predicated region
        $region29: #{tpu_custom_call.1} parent=11 // pred_check
          %p309 = pneg %p151
        $region30: #{tpu_custom_call.1} parent=11 // pred_check_branch
          %311 = sbr.rel (%p309) target = $region32
        $region31: #{tpu_custom_call.1} parent=11 // pred_region
          _
        $region32: #{tpu_custom_call.1} parent=11 // pred_fallthru
          _
        // Predicated region
        $region33: #{tpu_custom_call.1} parent=11 // pred_check
          %p312 = pneg %p172
        $region34: #{tpu_custom_call.1} parent=11 // pred_check_branch
          %314 = sbr.rel (%p312) target = $region36
        $region35: #{tpu_custom_call.1} parent=11 // pred_region
          _
        $region36: #{tpu_custom_call.1} parent=11 // pred_fallthru
          _
        // Predicated region
        $region37: #{tpu_custom_call.1} parent=11 // pred_check
          %p315 = pneg %p193
        $region38: #{tpu_custom_call.1} parent=11 // pred_check_branch
          %317 = sbr.rel (%p315) target = $region40
        $region39: #{tpu_custom_call.1} parent=11 // pred_region
          _
        $region40: #{tpu_custom_call.1} parent=11 // pred_fallthru
          _
        // Predicated region
        $region41: #{tpu_custom_call.1} parent=11 // pred_check
          %p318 = pneg %p214
        $region42: #{tpu_custom_call.1} parent=11 // pred_check_branch
          %320 = sbr.rel (%p318) target = $region44
        $region43: #{tpu_custom_call.1} parent=11 // pred_region
          _
        $region44: #{tpu_custom_call.1} parent=11 // pred_fallthru
          _
        // Predicated region
        $region45: #{tpu_custom_call.1} parent=11 // pred_check
          %p321 = pneg %p235
        $region46: #{tpu_custom_call.1} parent=11 // pred_check_branch
          %323 = sbr.rel (%p321) target = $region48
        $region47: #{tpu_custom_call.1} parent=11 // pred_region
          _
        $region48: #{tpu_custom_call.1} parent=11 // pred_fallthru
          _
        // Predicated region
        $region49: #{tpu_custom_call.1} parent=11 // pred_check
          %p324 = pneg %p256
        $region50: #{tpu_custom_call.1} parent=11 // pred_check_branch
          %326 = sbr.rel (%p324) target = $region52
        $region51: #{tpu_custom_call.1} parent=11 // pred_region
          _
        $region52: #{tpu_custom_call.1} parent=11 // pred_fallthru
          _
      $region12: #{tpu_custom_call.1} parent=5 // pred_fallthru
        _
      %p327 = scmp.lt.s32.totalorder %s20, 2
      // Predicated region
      $region53: #{tpu_custom_call.1} parent=5 // pred_check
        %p328 = pneg %p327
      $region54: #{tpu_custom_call.1} parent=5 // pred_check_branch
        %330 = sbr.rel (%p328) target = $region56
      $region55: #{tpu_custom_call.1} parent=5 // pred_region
        // Predicated region
        $region57: #{tpu_custom_call.1} parent=55 // pred_check
          %p331 = pneg %p40
        $region58: #{tpu_custom_call.1} parent=55 // pred_check_branch
          %333 = sbr.rel (%p331) target = $region60
        $region59: #{tpu_custom_call.1} parent=55 // pred_region
          %s334 = smul.u32 16, %s20
          %p335 = scmp.lt.s32.totalorder %s334, 31
          %s336 = scalar_select %p335, %s334, 31
          %s337 = smul.addr %s336, 4
          %s338 = scalar_lea.vmem %s0, %s337
          %s339 = smul.u32 16, %s20
        $region60: #{tpu_custom_call.1} parent=55 // pred_fallthru
          _
      $region56: #{tpu_custom_call.1} parent=5 // pred_fallthru
        _
      %p340 = scmp.le.s32.totalorder 1, %s20
      %p341 = scmp.lt.s32.totalorder %s20, 3
      %p342 = pnand %p340, %p341
      %p343 = pneg %p342
      // Predicated region
      $region61: #{tpu_custom_call.1} parent=5 // pred_check
        _
      $region62: #{tpu_custom_call.1} parent=5 // pred_check_branch
        %345 = sbr.rel (%p342) target = $region64
      $region63: #{tpu_custom_call.1} parent=5 // pred_region
        %s346 = ssub.s32 %s20, 1
        %s347 = smul.u32 16, %s25
        %p348 = scmp.lt.s32.totalorder %s347, 31
        %s349 = scalar_select %p348, %s347, 31
        %s350 = smul.addr %s349, 4
        %s351 = scalar_lea.vmem %s0, %s350
        %p352 = pneg %p46
        %p353 = pneg %p43
        %p354 = pneg %p67
        %p355 = pneg %p64
        %p356 = pneg %p88
        %p357 = pneg %p85
        %p358 = pneg %p109
        %p359 = pneg %p106
        %p360 = pneg %p130
        %p361 = pneg %p127
        %p362 = pneg %p151
        %p363 = pneg %p148
        %p364 = pneg %p172
        %p365 = pneg %p169
        %p366 = pneg %p193
        %p367 = pneg %p190
        %p368 = pneg %p214
        %p369 = pneg %p211
        %p370 = pneg %p235
        %p371 = pneg %p232
        %p372 = pneg %p256
        %p373 = pneg %p253
        %p374 = pneg %p282
        %p375 = pneg %p279
        %s376 = sand.u32 %s269, 1
        %s377 = scalar_lea.sflag [#allocation3], %s376
        %s378 = sand.u32 %s269, 1
        %s379 = smul.addr %s378, 2
        %s380 = scalar_lea.vmem [#allocation2], %s379
        %s381 = smul.u32 16, %s25
        %p382 = scmp.lt.s32.totalorder %s381, 31
        %s383 = scalar_select %p382, %s381, 31
        %s384 = smul.addr %s383, 4
        %s385 = scalar_lea.vmem %s0, %s384
        %s386 = smul.u32 16, %s25
        %v388 = vld [vmem:[%s385] sm:$0xf]
        %v389 = vld [vmem:[%s385 + $0x4] sm:$0xf]
        %v390 = vld [vmem:[%s385 + $0x8] sm:$0xf]
        %v391 = vld [vmem:[%s385 + $0xc] sm:$0xf]
        %v392 = vld [vmem:[%s385 + $0x10] sm:$0xf]
        %v393 = vld [vmem:[%s385 + $0x14] sm:$0xf]
        %v394 = vld [vmem:[%s385 + $0x18] sm:$0xf]
        %v395 = vld [vmem:[%s385 + $0x1c] sm:$0xf]
        %v396 = vld [vmem:[%s385 + $0x20] sm:$0xf]
        %v397 = vld [vmem:[%s385 + $0x24] sm:$0xf]
        %v398 = vld [vmem:[%s385 + $0x28] sm:$0xf]
        %v399 = vld [vmem:[%s385 + $0x2c] sm:$0xf]
        %v400 = vld [vmem:[%s385 + $0x30] sm:$0xf]
        %v401 = vld [vmem:[%s385 + $0x34] sm:$0xf]
        %v402 = vld [vmem:[%s385 + $0x38] sm:$0xf]
        %v403 = vld [vmem:[%s385 + $0x3c] sm:$0xf]
        %v404 = vld [vmem:[%s1] sm:$0xf]
        %v405 = vld [vmem:[%s1 + $0x4] sm:$0xf]
        %v406 = vld [vmem:[%s1 + $0x8] sm:$0xf]
        %v407 = vld [vmem:[%s1 + $0xc] sm:$0xf]
        %v408 = vld [vmem:[%s1 + $0x10] sm:$0xf]
        %v409 = vld [vmem:[%s1 + $0x14] sm:$0xf]
        %v410 = vld [vmem:[%s1 + $0x18] sm:$0xf]
        %v411 = vld [vmem:[%s1 + $0x1c] sm:$0xf]
        %v412 = vld [vmem:[%s2] sm:$0xf]
        %v413 = vld [vmem:[%s2 + $0x4] sm:$0xf]
        %v414 = vld [vmem:[%s2 + $0x8] sm:$0xf]
        %v415 = vld [vmem:[%s2 + $0xc] sm:$0xf]
        %v416 = vld [vmem:[%s2 + $0x10] sm:$0xf]
        %v417 = vld [vmem:[%s2 + $0x14] sm:$0xf]
        %v418 = vld [vmem:[%s2 + $0x18] sm:$0xf]
        %v419 = vld [vmem:[%s2 + $0x1c] sm:$0xf]
        %v420 = vunpack.c.l.bf16 %v412
        %v421 = vunpack.c.l.bf16 %v413
        %v422 = vunpack.c.l.bf16 %v414
        %v423 = vunpack.c.l.bf16 %v415
        %v424 = vunpack.c.l.bf16 %v416
        %v425 = vunpack.c.l.bf16 %v417
        %v426 = vunpack.c.l.bf16 %v418
        %v427 = vunpack.c.l.bf16 %v419
        %429 = vset.pattern.permute.xlu0 0
        %430 = vperm.xlu0 %429, %v420
        %v431 = vpop.permute.xlu0 %430
        %434 = vset.pattern.permute.xlu0 0
        %435 = vperm.xlu0 %434, %v421
        %v436 = vpop.permute.xlu0 %435
        %439 = vset.pattern.permute.xlu0 0
        %440 = vperm.xlu0 %439, %v422
        %v441 = vpop.permute.xlu0 %440
        %444 = vset.pattern.permute.xlu0 0
        %445 = vperm.xlu0 %444, %v423
        %v446 = vpop.permute.xlu0 %445
        %449 = vset.pattern.permute.xlu0 0
        %450 = vperm.xlu0 %449, %v424
        %v451 = vpop.permute.xlu0 %450
        %454 = vset.pattern.permute.xlu0 0
        %455 = vperm.xlu0 %454, %v425
        %v456 = vpop.permute.xlu0 %455
        %459 = vset.pattern.permute.xlu0 0
        %460 = vperm.xlu0 %459, %v426
        %v461 = vpop.permute.xlu0 %460
        %464 = vset.pattern.permute.xlu0 0
        %465 = vperm.xlu0 %464, %v427
        %v466 = vpop.permute.xlu0 %465
        %v476 = vunpack.c.l.b16 %v404
        %v477 = vunpack.c.l.b16 %v405
        %v478 = vunpack.c.l.b16 %v406
        %v479 = vunpack.c.l.b16 %v407
        %v480 = vunpack.c.l.b16 %v408
        %v481 = vunpack.c.l.b16 %v409
        %v482 = vunpack.c.l.b16 %v410
        %v483 = vunpack.c.l.b16 %v411
        %v484 = vpack.c.b16 %v477, %v476
        %v485 = vpack.c.b16 %v479, %v478
        %v486 = vpack.c.b16 %v481, %v480
        %v487 = vpack.c.b16 %v483, %v482
        %v504 = vunpack.c.l.b16 %v388
        %v505 = vunpack.c.l.b16 %v389
        %v506 = vunpack.c.l.b16 %v390
        %v507 = vunpack.c.l.b16 %v391
        %v508 = vunpack.c.l.b16 %v392
        %v509 = vunpack.c.l.b16 %v393
        %v510 = vunpack.c.l.b16 %v394
        %v511 = vunpack.c.l.b16 %v395
        %v512 = vunpack.c.l.b16 %v396
        %v513 = vunpack.c.l.b16 %v397
        %v514 = vunpack.c.l.b16 %v398
        %v515 = vunpack.c.l.b16 %v399
        %v516 = vunpack.c.l.b16 %v400
        %v517 = vunpack.c.l.b16 %v401
        %v518 = vunpack.c.l.b16 %v402
        %v519 = vunpack.c.l.b16 %v403
        %v520 = vpack.c.b16 %v505, %v504
        %v521 = vpack.c.b16 %v507, %v506
        %v522 = vpack.c.b16 %v509, %v508
        %v523 = vpack.c.b16 %v511, %v510
        %v524 = vpack.c.b16 %v513, %v512
        %v525 = vpack.c.b16 %v515, %v514
        %v526 = vpack.c.b16 %v517, %v516
        %v527 = vpack.c.b16 %v519, %v518
        %vm528 = vcmask 654336
        %v530 = vsel %vm528, %v484, 0
        %v533 = vsel %vm528, %v485, 0
        %v536 = vsel %vm528, %v486, 0
        %v539 = vsel %vm528, %v487, 0
        %v542 = vsel %vm528, %v520, 0
        %v545 = vsel %vm528, %v521, 0
        %v548 = vsel %vm528, %v522, 0
        %v551 = vsel %vm528, %v523, 0
        %v554 = vsel %vm528, %v524, 0
        %v557 = vsel %vm528, %v525, 0
        %v560 = vsel %vm528, %v526, 0
        %v563 = vsel %vm528, %v527, 0
        %565 = vmatprep.subr.bf16.mxu0 0
        %566 = vmatpush1.bf16.xpose.msra.mxu0 %v542
        %567 = vmatprep.subr.bf16.mxu0 0
        %568 = vmatpush1.bf16.xpose.msra.mxu0 %v545
        %569 = vmatprep.subr.bf16.mxu0 0
        %570 = vmatpush1.bf16.xpose.msra.mxu0 %v548
        %571 = vmatprep.subr.bf16.mxu0 0
        %572 = vmatpush1.bf16.xpose.msra.mxu0 %v551
        %573 = vmatprep.subr.bf16.mxu0 0
        %574 = vmatpush1.bf16.xpose.msra.mxu0 %v554
        %575 = vmatprep.subr.bf16.mxu0 0
        %576 = vmatpush1.bf16.xpose.msra.mxu0 %v557
        %577 = vmatprep.subr.bf16.mxu0 0
        %578 = vmatpush1.bf16.xpose.msra.mxu0 %v560
        %579 = vmatprep.subr.bf16.mxu0 0
        %580 = vmatpush1.bf16.xpose.msra.mxu0 %v563
        %581 = vmatprep.subr.bf16.mxu0 0
        %582 = vmatpush1.bf16.xpose.msra.mxu0 0
        %583 = vmatprep.subr.bf16.mxu0 0
        %584 = vmatpush1.bf16.xpose.msra.mxu0 0
        %585 = vmatprep.subr.bf16.mxu0 0
        %586 = vmatpush1.bf16.xpose.msra.mxu0 0
        %587 = vmatprep.subr.bf16.mxu0 0
        %588 = vmatpush1.bf16.xpose.msra.mxu0 0
        %589 = vmatprep.subr.bf16.mxu0 0
        %590 = vmatpush1.bf16.xpose.msra.mxu0 0
        %591 = vmatprep.subr.bf16.mxu0 0
        %592 = vmatpush1.bf16.xpose.msra.mxu0 0
        %593 = vmatprep.subr.bf16.mxu0 0
        %594 = vmatpush1.bf16.xpose.msra.mxu0 0
        %595 = vmatprep.subr.bf16.mxu0 0
        %596 = vmatpush1.bf16.xpose.msra.mxu0 0
        %597 = vmatprep.mubr.bf16.mxu0 0
        %598 = vmatmul.mubr.bf16.gmra.mrb[0].mxu0 %v530
        %v599 = vpop.f32.mrb[0].mxu0
        %v600 = vadd.f32 %v431, %v599
        %v601 = vpop.f32.mrb[0].mxu0
        %v602 = vpop.f32.mrb[0].mxu0
        %v603 = vadd.f32 %v436, %v602
        %v604 = vpop.f32.mrb[0].mxu0
        %605 = vmatprep.mubr.bf16.mxu0 0
        %606 = vmatmul.mubr.bf16.gmra.mrb[0].mxu0 %v533
        %v607 = vpop.f32.mrb[0].mxu0
        %v608 = vadd.f32 %v441, %v607
        %v609 = vpop.f32.mrb[0].mxu0
        %v610 = vpop.f32.mrb[0].mxu0
        %v611 = vadd.f32 %v446, %v610
        %v612 = vpop.f32.mrb[0].mxu0
        %613 = vmatprep.mubr.bf16.mxu0 0
        %614 = vmatmul.mubr.bf16.gmra.mrb[0].mxu0 %v536
        %v615 = vpop.f32.mrb[0].mxu0
        %v616 = vadd.f32 %v451, %v615
        %v617 = vpop.f32.mrb[0].mxu0
        %v618 = vpop.f32.mrb[0].mxu0
        %v619 = vadd.f32 %v456, %v618
        %v620 = vpop.f32.mrb[0].mxu0
        %621 = vmatprep.mubr.bf16.mxu0 0
        %622 = vmatmul.mubr.bf16.gmra.mrb[0].mxu0 %v539
        %v623 = vpop.f32.mrb[0].mxu0
        %v624 = vadd.f32 %v461, %v623
        %v625 = vpop.f32.mrb[0].mxu0
        %v626 = vpop.f32.mrb[0].mxu0
        %v627 = vadd.f32 %v466, %v626
        %v628 = vpop.f32.mrb[0].mxu0
        %629 = vdwg.mxu0
        %v630 = vmul.f32 %v600, 0.2
        %v631 = vmul.f32 %v603, 0.2
        %v632 = vmul.f32 %v608, 0.2
        %v633 = vmul.f32 %v611, 0.2
        %v634 = vmul.f32 %v616, 0.2
        %v635 = vmul.f32 %v619, 0.2
        %v636 = vmul.f32 %v624, 0.2
        %v637 = vmul.f32 %v627, 0.2
        %v638 = vmax.f32 %v600, %v630
        %v639 = vmax.f32 %v603, %v631
        %v640 = vmax.f32 %v608, %v632
        %v641 = vmax.f32 %v611, %v633
        %v642 = vmax.f32 %v616, %v634
        %v643 = vmax.f32 %v619, %v635
        %v644 = vmax.f32 %v624, %v636
        %v645 = vmax.f32 %v627, %v637
        %v646 = vpack.c.bf16 %v639, %v638
        %v647 = vpack.c.bf16 %v641, %v640
        %v648 = vpack.c.bf16 %v643, %v642
        %v649 = vpack.c.bf16 %v645, %v644
        %v650 = vld [vmem:[%s3] sm:$0xf]
        %v651 = vld [vmem:[%s3 + $0x4] sm:$0xf]
        %v652 = vld [vmem:[%s3 + $0x8] sm:$0xf]
        %v653 = vld [vmem:[%s3 + $0xc] sm:$0xf]
        %v654 = vld [vmem:[%s3 + $0x10] sm:$0xf]
        %v655 = vld [vmem:[%s3 + $0x14] sm:$0xf]
        %v656 = vld [vmem:[%s3 + $0x18] sm:$0xf]
        %v657 = vld [vmem:[%s3 + $0x1c] sm:$0xf]
        %v658 = vld [vmem:[%s4] sm:$0xf]
        %v659 = vld [vmem:[%s4 + $0x4] sm:$0xf]
        %v660 = vld [vmem:[%s4 + $0x8] sm:$0xf]
        %v661 = vld [vmem:[%s4 + $0xc] sm:$0xf]
        %v662 = vld [vmem:[%s4 + $0x10] sm:$0xf]
        %v663 = vld [vmem:[%s4 + $0x14] sm:$0xf]
        %v664 = vld [vmem:[%s4 + $0x18] sm:$0xf]
        %v665 = vld [vmem:[%s4 + $0x1c] sm:$0xf]
        %v666 = vunpack.c.l.bf16 %v658
        %v667 = vunpack.c.l.bf16 %v659
        %v668 = vunpack.c.l.bf16 %v660
        %v669 = vunpack.c.l.bf16 %v661
        %v670 = vunpack.c.l.bf16 %v662
        %v671 = vunpack.c.l.bf16 %v663
        %v672 = vunpack.c.l.bf16 %v664
        %v673 = vunpack.c.l.bf16 %v665
        %675 = vset.pattern.permute.xlu0 0
        %676 = vperm.xlu0 %675, %v666
        %v677 = vpop.permute.xlu0 %676
        %680 = vset.pattern.permute.xlu0 0
        %681 = vperm.xlu0 %680, %v667
        %v682 = vpop.permute.xlu0 %681
        %685 = vset.pattern.permute.xlu0 0
        %686 = vperm.xlu0 %685, %v668
        %v687 = vpop.permute.xlu0 %686
        %690 = vset.pattern.permute.xlu0 0
        %691 = vperm.xlu0 %690, %v669
        %v692 = vpop.permute.xlu0 %691
        %695 = vset.pattern.permute.xlu0 0
        %696 = vperm.xlu0 %695, %v670
        %v697 = vpop.permute.xlu0 %696
        %700 = vset.pattern.permute.xlu0 0
        %701 = vperm.xlu0 %700, %v671
        %v702 = vpop.permute.xlu0 %701
        %705 = vset.pattern.permute.xlu0 0
        %706 = vperm.xlu0 %705, %v672
        %v707 = vpop.permute.xlu0 %706
        %710 = vset.pattern.permute.xlu0 0
        %711 = vperm.xlu0 %710, %v673
        %v712 = vpop.permute.xlu0 %711
        %v722 = vunpack.c.l.b16 %v650
        %v723 = vunpack.c.l.b16 %v651
        %v724 = vunpack.c.l.b16 %v652
        %v725 = vunpack.c.l.b16 %v653
        %v726 = vunpack.c.l.b16 %v654
        %v727 = vunpack.c.l.b16 %v655
        %v728 = vunpack.c.l.b16 %v656
        %v729 = vunpack.c.l.b16 %v657
        %v730 = vpack.c.b16 %v723, %v722
        %v731 = vpack.c.b16 %v725, %v724
        %v732 = vpack.c.b16 %v727, %v726
        %v733 = vpack.c.b16 %v729, %v728
        %vm734 = vcmask 523264
        %v736 = vsel %vm734, %v730, 0
        %v739 = vsel %vm734, %v731, 0
        %v742 = vsel %vm734, %v732, 0
        %v745 = vsel %vm734, %v733, 0
        %747 = vmatprep.subr.bf16.mxu0 0
        %748 = vmatpush1.bf16.msra.mxu0 %v646
        %749 = vmatprep.subr.bf16.mxu0 0
        %750 = vmatpush1.bf16.msra.mxu0 %v647
        %751 = vmatprep.subr.bf16.mxu0 0
        %752 = vmatpush1.bf16.msra.mxu0 %v648
        %753 = vmatprep.subr.bf16.mxu0 0
        %754 = vmatpush1.bf16.msra.mxu0 %v649
        %755 = vmatprep.subr.bf16.mxu0 0
        %756 = vmatpush1.bf16.msra.mxu0 0
        %757 = vmatprep.subr.bf16.mxu0 0
        %758 = vmatpush1.bf16.msra.mxu0 0
        %759 = vmatprep.subr.bf16.mxu0 0
        %760 = vmatpush1.bf16.msra.mxu0 0
        %761 = vmatprep.subr.bf16.mxu0 0
        %762 = vmatpush1.bf16.msra.mxu0 0
        %763 = vmatprep.subr.bf16.mxu0 0
        %764 = vmatpush1.bf16.msra.mxu0 0
        %765 = vmatprep.subr.bf16.mxu0 0
        %766 = vmatpush1.bf16.msra.mxu0 0
        %767 = vmatprep.subr.bf16.mxu0 0
        %768 = vmatpush1.bf16.msra.mxu0 0
        %769 = vmatprep.subr.bf16.mxu0 0
        %770 = vmatpush1.bf16.msra.mxu0 0
        %771 = vmatprep.subr.bf16.mxu0 0
        %772 = vmatpush1.bf16.msra.mxu0 0
        %773 = vmatprep.subr.bf16.mxu0 0
        %774 = vmatpush1.bf16.msra.mxu0 0
        %775 = vmatprep.subr.bf16.mxu0 0
        %776 = vmatpush1.bf16.msra.mxu0 0
        %777 = vmatprep.subr.bf16.mxu0 0
        %778 = vmatpush1.bf16.msra.mxu0 0
        %779 = vmatprep.mubr.bf16.mxu0 0
        %780 = vmatmul.mubr.bf16.gmra.mrb[0].mxu0 %v736
        %v781 = vpop.f32.mrb[0].mxu0
        %v782 = vadd.f32 %v677, %v781
        %v783 = vpop.f32.mrb[0].mxu0
        %v784 = vpop.f32.mrb[0].mxu0
        %v785 = vadd.f32 %v682, %v784
        %v786 = vpop.f32.mrb[0].mxu0
        %787 = vmatprep.mubr.bf16.mxu0 0
        %788 = vmatmul.mubr.bf16.gmra.mrb[0].mxu0 %v739
        %v789 = vpop.f32.mrb[0].mxu0
        %v790 = vadd.f32 %v687, %v789
        %v791 = vpop.f32.mrb[0].mxu0
        %v792 = vpop.f32.mrb[0].mxu0
        %v793 = vadd.f32 %v692, %v792
        %v794 = vpop.f32.mrb[0].mxu0
        %795 = vmatprep.mubr.bf16.mxu0 0
        %796 = vmatmul.mubr.bf16.gmra.mrb[0].mxu0 %v742
        %v797 = vpop.f32.mrb[0].mxu0
        %v798 = vadd.f32 %v697, %v797
        %v799 = vpop.f32.mrb[0].mxu0
        %v800 = vpop.f32.mrb[0].mxu0
        %v801 = vadd.f32 %v702, %v800
        %v802 = vpop.f32.mrb[0].mxu0
        %803 = vmatprep.mubr.bf16.mxu0 0
        %804 = vmatmul.mubr.bf16.gmra.mrb[0].mxu0 %v745
        %v805 = vpop.f32.mrb[0].mxu0
        %v806 = vadd.f32 %v707, %v805
        %v807 = vpop.f32.mrb[0].mxu0
        %v808 = vpop.f32.mrb[0].mxu0
        %v809 = vadd.f32 %v712, %v808
        %v810 = vpop.f32.mrb[0].mxu0
        %811 = vdwg.mxu0
        %v812 = vmul.f32 %v782, 0.2
        %v813 = vmul.f32 %v785, 0.2
        %v814 = vmul.f32 %v790, 0.2
        %v815 = vmul.f32 %v793, 0.2
        %v816 = vmul.f32 %v798, 0.2
        %v817 = vmul.f32 %v801, 0.2
        %v818 = vmul.f32 %v806, 0.2
        %v819 = vmul.f32 %v809, 0.2
        %v820 = vmax.f32 %v782, %v812
        %v821 = vmax.f32 %v785, %v813
        %v822 = vmax.f32 %v790, %v814
        %v823 = vmax.f32 %v793, %v815
        %v824 = vmax.f32 %v798, %v816
        %v825 = vmax.f32 %v801, %v817
        %v826 = vmax.f32 %v806, %v818
        %v827 = vmax.f32 %v809, %v819
        %v828 = vpack.c.bf16 %v821, %v820
        %v829 = vpack.c.bf16 %v823, %v822
        %v830 = vpack.c.bf16 %v825, %v824
        %v831 = vpack.c.bf16 %v827, %v826
        %s832 = scalar_lea.vmem %s3, 32
        %v833 = vld [vmem:[%s832] sm:$0xf]
        %v834 = vld [vmem:[%s832 + $0x4] sm:$0xf]
        %v835 = vld [vmem:[%s832 + $0x8] sm:$0xf]
        %v836 = vld [vmem:[%s832 + $0xc] sm:$0xf]
        %v837 = vld [vmem:[%s832 + $0x10] sm:$0xf]
        %v838 = vld [vmem:[%s832 + $0x14] sm:$0xf]
        %v839 = vld [vmem:[%s832 + $0x18] sm:$0xf]
        %v840 = vld [vmem:[%s832 + $0x1c] sm:$0xf]
        %s841 = scalar_lea.vmem %s4, 32
        %v842 = vld [vmem:[%s841] sm:$0xf]
        %v843 = vld [vmem:[%s841 + $0x4] sm:$0xf]
        %v844 = vld [vmem:[%s841 + $0x8] sm:$0xf]
        %v845 = vld [vmem:[%s841 + $0xc] sm:$0xf]
        %v846 = vld [vmem:[%s841 + $0x10] sm:$0xf]
        %v847 = vld [vmem:[%s841 + $0x14] sm:$0xf]
        %v848 = vld [vmem:[%s841 + $0x18] sm:$0xf]
        %v849 = vld [vmem:[%s841 + $0x1c] sm:$0xf]
        %v850 = vunpack.c.l.bf16 %v842
        %v851 = vunpack.c.l.bf16 %v843
        %v852 = vunpack.c.l.bf16 %v844
        %v853 = vunpack.c.l.bf16 %v845
        %v854 = vunpack.c.l.bf16 %v846
        %v855 = vunpack.c.l.bf16 %v847
        %v856 = vunpack.c.l.bf16 %v848
        %v857 = vunpack.c.l.bf16 %v849
        %859 = vset.pattern.permute.xlu0 0
        %860 = vperm.xlu0 %859, %v850
        %v861 = vpop.permute.xlu0 %860
        %864 = vset.pattern.permute.xlu0 0
        %865 = vperm.xlu0 %864, %v851
        %v866 = vpop.permute.xlu0 %865
        %869 = vset.pattern.permute.xlu0 0
        %870 = vperm.xlu0 %869, %v852
        %v871 = vpop.permute.xlu0 %870
        %874 = vset.pattern.permute.xlu0 0
        %875 = vperm.xlu0 %874, %v853
        %v876 = vpop.permute.xlu0 %875
        %879 = vset.pattern.permute.xlu0 0
        %880 = vperm.xlu0 %879, %v854
        %v881 = vpop.permute.xlu0 %880
        %884 = vset.pattern.permute.xlu0 0
        %885 = vperm.xlu0 %884, %v855
        %v886 = vpop.permute.xlu0 %885
        %889 = vset.pattern.permute.xlu0 0
        %890 = vperm.xlu0 %889, %v856
        %v891 = vpop.permute.xlu0 %890
        %894 = vset.pattern.permute.xlu0 0
        %895 = vperm.xlu0 %894, %v857
        %v896 = vpop.permute.xlu0 %895
        %v906 = vunpack.c.l.b16 %v833
        %v907 = vunpack.c.l.b16 %v834
        %v908 = vunpack.c.l.b16 %v835
        %v909 = vunpack.c.l.b16 %v836
        %v910 = vunpack.c.l.b16 %v837
        %v911 = vunpack.c.l.b16 %v838
        %v912 = vunpack.c.l.b16 %v839
        %v913 = vunpack.c.l.b16 %v840
        %v914 = vpack.c.b16 %v907, %v906
        %v915 = vpack.c.b16 %v909, %v908
        %v916 = vpack.c.b16 %v911, %v910
        %v917 = vpack.c.b16 %v913, %v912
        %v919 = vsel %vm734, %v914, 0
        %v922 = vsel %vm734, %v915, 0
        %v925 = vsel %vm734, %v916, 0
        %v928 = vsel %vm734, %v917, 0
        %930 = vmatprep.subr.bf16.mxu0 0
        %931 = vmatpush1.bf16.msra.mxu0 %v828
        %932 = vmatprep.subr.bf16.mxu0 0
        %933 = vmatpush1.bf16.msra.mxu0 %v829
        %934 = vmatprep.subr.bf16.mxu0 0
        %935 = vmatpush1.bf16.msra.mxu0 %v830
        %936 = vmatprep.subr.bf16.mxu0 0
        %937 = vmatpush1.bf16.msra.mxu0 %v831
        %938 = vmatprep.subr.bf16.mxu0 0
        %939 = vmatpush1.bf16.msra.mxu0 0
        %940 = vmatprep.subr.bf16.mxu0 0
        %941 = vmatpush1.bf16.msra.mxu0 0
        %942 = vmatprep.subr.bf16.mxu0 0
        %943 = vmatpush1.bf16.msra.mxu0 0
        %944 = vmatprep.subr.bf16.mxu0 0
        %945 = vmatpush1.bf16.msra.mxu0 0
        %946 = vmatprep.subr.bf16.mxu0 0
        %947 = vmatpush1.bf16.msra.mxu0 0
        %948 = vmatprep.subr.bf16.mxu0 0
        %949 = vmatpush1.bf16.msra.mxu0 0
        %950 = vmatprep.subr.bf16.mxu0 0
        %951 = vmatpush1.bf16.msra.mxu0 0
        %952 = vmatprep.subr.bf16.mxu0 0
        %953 = vmatpush1.bf16.msra.mxu0 0
        %954 = vmatprep.subr.bf16.mxu0 0
        %955 = vmatpush1.bf16.msra.mxu0 0
        %956 = vmatprep.subr.bf16.mxu0 0
        %957 = vmatpush1.bf16.msra.mxu0 0
        %958 = vmatprep.subr.bf16.mxu0 0
        %959 = vmatpush1.bf16.msra.mxu0 0
        %960 = vmatprep.subr.bf16.mxu0 0
        %961 = vmatpush1.bf16.msra.mxu0 0
        %962 = vmatprep.mubr.bf16.mxu0 0
        %963 = vmatmul.mubr.bf16.gmra.mrb[0].mxu0 %v919
        %v964 = vpop.f32.mrb[0].mxu0
        %v965 = vadd.f32 %v861, %v964
        %v966 = vpop.f32.mrb[0].mxu0
        %v967 = vpop.f32.mrb[0].mxu0
        %v968 = vadd.f32 %v866, %v967
        %v969 = vpop.f32.mrb[0].mxu0
        %970 = vmatprep.mubr.bf16.mxu0 0
        %971 = vmatmul.mubr.bf16.gmra.mrb[0].mxu0 %v922
        %v972 = vpop.f32.mrb[0].mxu0
        %v973 = vadd.f32 %v871, %v972
        %v974 = vpop.f32.mrb[0].mxu0
        %v975 = vpop.f32.mrb[0].mxu0
        %v976 = vadd.f32 %v876, %v975
        %v977 = vpop.f32.mrb[0].mxu0
        %978 = vmatprep.mubr.bf16.mxu0 0
        %979 = vmatmul.mubr.bf16.gmra.mrb[0].mxu0 %v925
        %v980 = vpop.f32.mrb[0].mxu0
        %v981 = vadd.f32 %v881, %v980
        %v982 = vpop.f32.mrb[0].mxu0
        %v983 = vpop.f32.mrb[0].mxu0
        %v984 = vadd.f32 %v886, %v983
        %v985 = vpop.f32.mrb[0].mxu0
        %986 = vmatprep.mubr.bf16.mxu0 0
        %987 = vmatmul.mubr.bf16.gmra.mrb[0].mxu0 %v928
        %v988 = vpop.f32.mrb[0].mxu0
        %v989 = vadd.f32 %v891, %v988
        %v990 = vpop.f32.mrb[0].mxu0
        %v991 = vpop.f32.mrb[0].mxu0
        %v992 = vadd.f32 %v896, %v991
        %v993 = vpop.f32.mrb[0].mxu0
        %994 = vdwg.mxu0
        %v995 = vmul.f32 %v965, 0.2
        %v996 = vmul.f32 %v968, 0.2
        %v997 = vmul.f32 %v973, 0.2
        %v998 = vmul.f32 %v976, 0.2
        %v999 = vmul.f32 %v981, 0.2
        %v1000 = vmul.f32 %v984, 0.2
        %v1001 = vmul.f32 %v989, 0.2
        %v1002 = vmul.f32 %v992, 0.2
        %v1003 = vmax.f32 %v965, %v995
        %v1004 = vmax.f32 %v968, %v996
        %v1005 = vmax.f32 %v973, %v997
        %v1006 = vmax.f32 %v976, %v998
        %v1007 = vmax.f32 %v981, %v999
        %v1008 = vmax.f32 %v984, %v1000
        %v1009 = vmax.f32 %v989, %v1001
        %v1010 = vmax.f32 %v992, %v1002
        %v1011 = vpack.c.bf16 %v1004, %v1003
        %v1012 = vpack.c.bf16 %v1006, %v1005
        %v1013 = vpack.c.bf16 %v1008, %v1007
        %v1014 = vpack.c.bf16 %v1010, %v1009
        %s1015 = scalar_lea.vmem %s3, 64
        %v1016 = vld [vmem:[%s1015] sm:$0xf]
        %v1017 = vld [vmem:[%s1015 + $0x4] sm:$0xf]
        %v1018 = vld [vmem:[%s1015 + $0x8] sm:$0xf]
        %v1019 = vld [vmem:[%s1015 + $0xc] sm:$0xf]
        %v1020 = vld [vmem:[%s1015 + $0x10] sm:$0xf]
        %v1021 = vld [vmem:[%s1015 + $0x14] sm:$0xf]
        %v1022 = vld [vmem:[%s1015 + $0x18] sm:$0xf]
        %v1023 = vld [vmem:[%s1015 + $0x1c] sm:$0xf]
        %s1024 = scalar_lea.vmem %s4, 64
        %v1025 = vld [vmem:[%s1024] sm:$0xf]
        %v1026 = vld [vmem:[%s1024 + $0x4] sm:$0xf]
        %v1027 = vld [vmem:[%s1024 + $0x8] sm:$0xf]
        %v1028 = vld [vmem:[%s1024 + $0xc] sm:$0xf]
        %v1029 = vld [vmem:[%s1024 + $0x10] sm:$0xf]
        %v1030 = vld [vmem:[%s1024 + $0x14] sm:$0xf]
        %v1031 = vld [vmem:[%s1024 + $0x18] sm:$0xf]
        %v1032 = vld [vmem:[%s1024 + $0x1c] sm:$0xf]
        %v1033 = vunpack.c.l.bf16 %v1025
        %v1034 = vunpack.c.l.bf16 %v1026
        %v1035 = vunpack.c.l.bf16 %v1027
        %v1036 = vunpack.c.l.bf16 %v1028
        %v1037 = vunpack.c.l.bf16 %v1029
        %v1038 = vunpack.c.l.bf16 %v1030
        %v1039 = vunpack.c.l.bf16 %v1031
        %v1040 = vunpack.c.l.bf16 %v1032
        %1042 = vset.pattern.permute.xlu0 0
        %1043 = vperm.xlu0 %1042, %v1033
        %v1044 = vpop.permute.xlu0 %1043
        %1047 = vset.pattern.permute.xlu0 0
        %1048 = vperm.xlu0 %1047, %v1034
        %v1049 = vpop.permute.xlu0 %1048
        %1052 = vset.pattern.permute.xlu0 0
        %1053 = vperm.xlu0 %1052, %v1035
        %v1054 = vpop.permute.xlu0 %1053
        %1057 = vset.pattern.permute.xlu0 0
        %1058 = vperm.xlu0 %1057, %v1036
        %v1059 = vpop.permute.xlu0 %1058
        %1062 = vset.pattern.permute.xlu0 0
        %1063 = vperm.xlu0 %1062, %v1037
        %v1064 = vpop.permute.xlu0 %1063
        %1067 = vset.pattern.permute.xlu0 0
        %1068 = vperm.xlu0 %1067, %v1038
        %v1069 = vpop.permute.xlu0 %1068
        %1072 = vset.pattern.permute.xlu0 0
        %1073 = vperm.xlu0 %1072, %v1039
        %v1074 = vpop.permute.xlu0 %1073
        %1077 = vset.pattern.permute.xlu0 0
        %1078 = vperm.xlu0 %1077, %v1040
        %v1079 = vpop.permute.xlu0 %1078
        %v1089 = vunpack.c.l.b16 %v1016
        %v1090 = vunpack.c.l.b16 %v1017
        %v1091 = vunpack.c.l.b16 %v1018
        %v1092 = vunpack.c.l.b16 %v1019
        %v1093 = vunpack.c.l.b16 %v1020
        %v1094 = vunpack.c.l.b16 %v1021
        %v1095 = vunpack.c.l.b16 %v1022
        %v1096 = vunpack.c.l.b16 %v1023
        %v1097 = vpack.c.b16 %v1090, %v1089
        %v1098 = vpack.c.b16 %v1092, %v1091
        %v1099 = vpack.c.b16 %v1094, %v1093
        %v1100 = vpack.c.b16 %v1096, %v1095
        %v1102 = vsel %vm734, %v1097, 0
        %v1105 = vsel %vm734, %v1098, 0
        %v1108 = vsel %vm734, %v1099, 0
        %v1111 = vsel %vm734, %v1100, 0
        %1113 = vmatprep.subr.bf16.mxu0 0
        %1114 = vmatpush1.bf16.msra.mxu0 %v1011
        %1115 = vmatprep.subr.bf16.mxu0 0
        %1116 = vmatpush1.bf16.msra.mxu0 %v1012
        %1117 = vmatprep.subr.bf16.mxu0 0
        %1118 = vmatpush1.bf16.msra.mxu0 %v1013
        %1119 = vmatprep.subr.bf16.mxu0 0
        %1120 = vmatpush1.bf16.msra.mxu0 %v1014
        %1121 = vmatprep.subr.bf16.mxu0 0
        %1122 = vmatpush1.bf16.msra.mxu0 0
        %1123 = vmatprep.subr.bf16.mxu0 0
        %1124 = vmatpush1.bf16.msra.mxu0 0
        %1125 = vmatprep.subr.bf16.mxu0 0
        %1126 = vmatpush1.bf16.msra.mxu0 0
        %1127 = vmatprep.subr.bf16.mxu0 0
        %1128 = vmatpush1.bf16.msra.mxu0 0
        %1129 = vmatprep.subr.bf16.mxu0 0
        %1130 = vmatpush1.bf16.msra.mxu0 0
        %1131 = vmatprep.subr.bf16.mxu0 0
        %1132 = vmatpush1.bf16.msra.mxu0 0
        %1133 = vmatprep.subr.bf16.mxu0 0
        %1134 = vmatpush1.bf16.msra.mxu0 0
        %1135 = vmatprep.subr.bf16.mxu0 0
        %1136 = vmatpush1.bf16.msra.mxu0 0
        %1137 = vmatprep.subr.bf16.mxu0 0
        %1138 = vmatpush1.bf16.msra.mxu0 0
        %1139 = vmatprep.subr.bf16.mxu0 0
        %1140 = vmatpush1.bf16.msra.mxu0 0
        %1141 = vmatprep.subr.bf16.mxu0 0
        %1142 = vmatpush1.bf16.msra.mxu0 0
        %1143 = vmatprep.subr.bf16.mxu0 0
        %1144 = vmatpush1.bf16.msra.mxu0 0
        %1145 = vmatprep.mubr.bf16.mxu0 0
        %1146 = vmatmul.mubr.bf16.gmra.mrb[0].mxu0 %v1102
        %v1147 = vpop.f32.mrb[0].mxu0
        %v1148 = vadd.f32 %v1044, %v1147
        %v1149 = vpop.f32.mrb[0].mxu0
        %v1150 = vpop.f32.mrb[0].mxu0
        %v1151 = vadd.f32 %v1049, %v1150
        %v1152 = vpop.f32.mrb[0].mxu0
        %1153 = vmatprep.mubr.bf16.mxu0 0
        %1154 = vmatmul.mubr.bf16.gmra.mrb[0].mxu0 %v1105
        %v1155 = vpop.f32.mrb[0].mxu0
        %v1156 = vadd.f32 %v1054, %v1155
        %v1157 = vpop.f32.mrb[0].mxu0
        %v1158 = vpop.f32.mrb[0].mxu0
        %v1159 = vadd.f32 %v1059, %v1158
        %v1160 = vpop.f32.mrb[0].mxu0
        %1161 = vmatprep.mubr.bf16.mxu0 0
        %1162 = vmatmul.mubr.bf16.gmra.mrb[0].mxu0 %v1108
        %v1163 = vpop.f32.mrb[0].mxu0
        %v1164 = vadd.f32 %v1064, %v1163
        %v1165 = vpop.f32.mrb[0].mxu0
        %v1166 = vpop.f32.mrb[0].mxu0
        %v1167 = vadd.f32 %v1069, %v1166
        %v1168 = vpop.f32.mrb[0].mxu0
        %1169 = vmatprep.mubr.bf16.mxu0 0
        %1170 = vmatmul.mubr.bf16.gmra.mrb[0].mxu0 %v1111
        %v1171 = vpop.f32.mrb[0].mxu0
        %v1172 = vadd.f32 %v1074, %v1171
        %v1173 = vpop.f32.mrb[0].mxu0
        %v1174 = vpop.f32.mrb[0].mxu0
        %v1175 = vadd.f32 %v1079, %v1174
        %v1176 = vpop.f32.mrb[0].mxu0
        %1177 = vdwg.mxu0
        %v1178 = vmul.f32 %v1148, 0.2
        %v1179 = vmul.f32 %v1151, 0.2
        %v1180 = vmul.f32 %v1156, 0.2
        %v1181 = vmul.f32 %v1159, 0.2
        %v1182 = vmul.f32 %v1164, 0.2
        %v1183 = vmul.f32 %v1167, 0.2
        %v1184 = vmul.f32 %v1172, 0.2
        %v1185 = vmul.f32 %v1175, 0.2
        %v1186 = vmax.f32 %v1148, %v1178
        %v1187 = vmax.f32 %v1151, %v1179
        %v1188 = vmax.f32 %v1156, %v1180
        %v1189 = vmax.f32 %v1159, %v1181
        %v1190 = vmax.f32 %v1164, %v1182
        %v1191 = vmax.f32 %v1167, %v1183
        %v1192 = vmax.f32 %v1172, %v1184
        %v1193 = vmax.f32 %v1175, %v1185
        %v1194 = vpack.c.bf16 %v1187, %v1186
        %v1195 = vpack.c.bf16 %v1189, %v1188
        %v1196 = vpack.c.bf16 %v1191, %v1190
        %v1197 = vpack.c.bf16 %v1193, %v1192
        %s1198 = scalar_lea.vmem %s3, 96
        %v1199 = vld [vmem:[%s1198] sm:$0xf]
        %v1200 = vld [vmem:[%s1198 + $0x4] sm:$0xf]
        %v1201 = vld [vmem:[%s1198 + $0x8] sm:$0xf]
        %v1202 = vld [vmem:[%s1198 + $0xc] sm:$0xf]
        %v1203 = vld [vmem:[%s1198 + $0x10] sm:$0xf]
        %v1204 = vld [vmem:[%s1198 + $0x14] sm:$0xf]
        %v1205 = vld [vmem:[%s1198 + $0x18] sm:$0xf]
        %v1206 = vld [vmem:[%s1198 + $0x1c] sm:$0xf]
        %s1207 = scalar_lea.vmem %s4, 96
        %v1208 = vld [vmem:[%s1207] sm:$0xf]
        %v1209 = vld [vmem:[%s1207 + $0x4] sm:$0xf]
        %v1210 = vld [vmem:[%s1207 + $0x8] sm:$0xf]
        %v1211 = vld [vmem:[%s1207 + $0xc] sm:$0xf]
        %v1212 = vld [vmem:[%s1207 + $0x10] sm:$0xf]
        %v1213 = vld [vmem:[%s1207 + $0x14] sm:$0xf]
        %v1214 = vld [vmem:[%s1207 + $0x18] sm:$0xf]
        %v1215 = vld [vmem:[%s1207 + $0x1c] sm:$0xf]
        %v1216 = vunpack.c.l.bf16 %v1208
        %v1217 = vunpack.c.l.bf16 %v1209
        %v1218 = vunpack.c.l.bf16 %v1210
        %v1219 = vunpack.c.l.bf16 %v1211
        %v1220 = vunpack.c.l.bf16 %v1212
        %v1221 = vunpack.c.l.bf16 %v1213
        %v1222 = vunpack.c.l.bf16 %v1214
        %v1223 = vunpack.c.l.bf16 %v1215
        %1225 = vset.pattern.permute.xlu0 0
        %1226 = vperm.xlu0 %1225, %v1216
        %v1227 = vpop.permute.xlu0 %1226
        %1230 = vset.pattern.permute.xlu0 0
        %1231 = vperm.xlu0 %1230, %v1217
        %v1232 = vpop.permute.xlu0 %1231
        %1235 = vset.pattern.permute.xlu0 0
        %1236 = vperm.xlu0 %1235, %v1218
        %v1237 = vpop.permute.xlu0 %1236
        %1240 = vset.pattern.permute.xlu0 0
        %1241 = vperm.xlu0 %1240, %v1219
        %v1242 = vpop.permute.xlu0 %1241
        %1245 = vset.pattern.permute.xlu0 0
        %1246 = vperm.xlu0 %1245, %v1220
        %v1247 = vpop.permute.xlu0 %1246
        %1250 = vset.pattern.permute.xlu0 0
        %1251 = vperm.xlu0 %1250, %v1221
        %v1252 = vpop.permute.xlu0 %1251
        %1255 = vset.pattern.permute.xlu0 0
        %1256 = vperm.xlu0 %1255, %v1222
        %v1257 = vpop.permute.xlu0 %1256
        %1260 = vset.pattern.permute.xlu0 0
        %1261 = vperm.xlu0 %1260, %v1223
        %v1262 = vpop.permute.xlu0 %1261
        %v1272 = vunpack.c.l.b16 %v1199
        %v1273 = vunpack.c.l.b16 %v1200
        %v1274 = vunpack.c.l.b16 %v1201
        %v1275 = vunpack.c.l.b16 %v1202
        %v1276 = vunpack.c.l.b16 %v1203
        %v1277 = vunpack.c.l.b16 %v1204
        %v1278 = vunpack.c.l.b16 %v1205
        %v1279 = vunpack.c.l.b16 %v1206
        %v1280 = vpack.c.b16 %v1273, %v1272
        %v1281 = vpack.c.b16 %v1275, %v1274
        %v1282 = vpack.c.b16 %v1277, %v1276
        %v1283 = vpack.c.b16 %v1279, %v1278
        %v1285 = vsel %vm734, %v1280, 0
        %v1288 = vsel %vm734, %v1281, 0
        %v1291 = vsel %vm734, %v1282, 0
        %v1294 = vsel %vm734, %v1283, 0
        %1296 = vmatprep.subr.bf16.mxu0 0
        %1297 = vmatpush1.bf16.msra.mxu0 %v1194
        %1298 = vmatprep.subr.bf16.mxu0 0
        %1299 = vmatpush1.bf16.msra.mxu0 %v1195
        %1300 = vmatprep.subr.bf16.mxu0 0
        %1301 = vmatpush1.bf16.msra.mxu0 %v1196
        %1302 = vmatprep.subr.bf16.mxu0 0
        %1303 = vmatpush1.bf16.msra.mxu0 %v1197
        %1304 = vmatprep.subr.bf16.mxu0 0
        %1305 = vmatpush1.bf16.msra.mxu0 0
        %1306 = vmatprep.subr.bf16.mxu0 0
        %1307 = vmatpush1.bf16.msra.mxu0 0
        %1308 = vmatprep.subr.bf16.mxu0 0
        %1309 = vmatpush1.bf16.msra.mxu0 0
        %1310 = vmatprep.subr.bf16.mxu0 0
        %1311 = vmatpush1.bf16.msra.mxu0 0
        %1312 = vmatprep.subr.bf16.mxu0 0
        %1313 = vmatpush1.bf16.msra.mxu0 0
        %1314 = vmatprep.subr.bf16.mxu0 0
        %1315 = vmatpush1.bf16.msra.mxu0 0
        %1316 = vmatprep.subr.bf16.mxu0 0
        %1317 = vmatpush1.bf16.msra.mxu0 0
        %1318 = vmatprep.subr.bf16.mxu0 0
        %1319 = vmatpush1.bf16.msra.mxu0 0
        %1320 = vmatprep.subr.bf16.mxu0 0
        %1321 = vmatpush1.bf16.msra.mxu0 0
        %1322 = vmatprep.subr.bf16.mxu0 0
        %1323 = vmatpush1.bf16.msra.mxu0 0
        %1324 = vmatprep.subr.bf16.mxu0 0
        %1325 = vmatpush1.bf16.msra.mxu0 0
        %1326 = vmatprep.subr.bf16.mxu0 0
        %1327 = vmatpush1.bf16.msra.mxu0 0
        %1328 = vmatprep.mubr.bf16.mxu0 0
        %1329 = vmatmul.mubr.bf16.gmra.mrb[0].mxu0 %v1285
        %v1330 = vpop.f32.mrb[0].mxu0
        %v1331 = vadd.f32 %v1227, %v1330
        %v1332 = vpop.f32.mrb[0].mxu0
        %v1333 = vpop.f32.mrb[0].mxu0
        %v1334 = vadd.f32 %v1232, %v1333
        %v1335 = vpop.f32.mrb[0].mxu0
        %1336 = vmatprep.mubr.bf16.mxu0 0
        %1337 = vmatmul.mubr.bf16.gmra.mrb[0].mxu0 %v1288
        %v1338 = vpop.f32.mrb[0].mxu0
        %v1339 = vadd.f32 %v1237, %v1338
        %v1340 = vpop.f32.mrb[0].mxu0
        %v1341 = vpop.f32.mrb[0].mxu0
        %v1342 = vadd.f32 %v1242, %v1341
        %v1343 = vpop.f32.mrb[0].mxu0
        %1344 = vmatprep.mubr.bf16.mxu0 0
        %1345 = vmatmul.mubr.bf16.gmra.mrb[0].mxu0 %v1291
        %v1346 = vpop.f32.mrb[0].mxu0
        %v1347 = vadd.f32 %v1247, %v1346
        %v1348 = vpop.f32.mrb[0].mxu0
        %v1349 = vpop.f32.mrb[0].mxu0
        %v1350 = vadd.f32 %v1252, %v1349
        %v1351 = vpop.f32.mrb[0].mxu0
        %1352 = vmatprep.mubr.bf16.mxu0 0
        %1353 = vmatmul.mubr.bf16.gmra.mrb[0].mxu0 %v1294
        %v1354 = vpop.f32.mrb[0].mxu0
        %v1355 = vadd.f32 %v1257, %v1354
        %v1356 = vpop.f32.mrb[0].mxu0
        %v1357 = vpop.f32.mrb[0].mxu0
        %v1358 = vadd.f32 %v1262, %v1357
        %v1359 = vpop.f32.mrb[0].mxu0
        %1360 = vdwg.mxu0
        %v1361 = vmul.f32 %v1331, 0.2
        %v1362 = vmul.f32 %v1334, 0.2
        %v1363 = vmul.f32 %v1339, 0.2
        %v1364 = vmul.f32 %v1342, 0.2
        %v1365 = vmul.f32 %v1347, 0.2
        %v1366 = vmul.f32 %v1350, 0.2
        %v1367 = vmul.f32 %v1355, 0.2
        %v1368 = vmul.f32 %v1358, 0.2
        %v1369 = vmax.f32 %v1331, %v1361
        %v1370 = vmax.f32 %v1334, %v1362
        %v1371 = vmax.f32 %v1339, %v1363
        %v1372 = vmax.f32 %v1342, %v1364
        %v1373 = vmax.f32 %v1347, %v1365
        %v1374 = vmax.f32 %v1350, %v1366
        %v1375 = vmax.f32 %v1355, %v1367
        %v1376 = vmax.f32 %v1358, %v1368
        %v1377 = vpack.c.bf16 %v1370, %v1369
        %v1378 = vpack.c.bf16 %v1372, %v1371
        %v1379 = vpack.c.bf16 %v1374, %v1373
        %v1380 = vpack.c.bf16 %v1376, %v1375
        %v1381 = vld [vmem:[%s5] sm:$0xf]
        %v1382 = vld [vmem:[%s5 + $0x4] sm:$0xf]
        %v1383 = vld [vmem:[%s5 + $0x8] sm:$0xf]
        %v1384 = vld [vmem:[%s5 + $0xc] sm:$0xf]
        %v1385 = vld [vmem:[%s5 + $0x10] sm:$0xf]
        %v1386 = vld [vmem:[%s5 + $0x14] sm:$0xf]
        %v1387 = vld [vmem:[%s5 + $0x18] sm:$0xf]
        %v1388 = vld [vmem:[%s5 + $0x1c] sm:$0xf]
        %v1389 = vld [vmem:[%s5 + $0x20] sm:$0xf]
        %v1390 = vld [vmem:[%s5 + $0x24] sm:$0xf]
        %v1391 = vld [vmem:[%s5 + $0x28] sm:$0xf]
        %v1392 = vld [vmem:[%s5 + $0x2c] sm:$0xf]
        %v1393 = vld [vmem:[%s5 + $0x30] sm:$0xf]
        %v1394 = vld [vmem:[%s5 + $0x34] sm:$0xf]
        %v1395 = vld [vmem:[%s5 + $0x38] sm:$0xf]
        %v1396 = vld [vmem:[%s5 + $0x3c] sm:$0xf]
        %v1397 = vld [vmem:[%s6] sm:$0xf]
        %v1398 = vld [vmem:[%s6 + $0x4] sm:$0xf]
        %v1399 = vld [vmem:[%s6 + $0x8] sm:$0xf]
        %v1400 = vld [vmem:[%s6 + $0xc] sm:$0xf]
        %v1401 = vld [vmem:[%s6 + $0x10] sm:$0xf]
        %v1402 = vld [vmem:[%s6 + $0x14] sm:$0xf]
        %v1403 = vld [vmem:[%s6 + $0x18] sm:$0xf]
        %v1404 = vld [vmem:[%s6 + $0x1c] sm:$0xf]
        %v1405 = vld [vmem:[%s6 + $0x20] sm:$0xf]
        %v1406 = vld [vmem:[%s6 + $0x24] sm:$0xf]
        %v1407 = vld [vmem:[%s6 + $0x28] sm:$0xf]
        %v1408 = vld [vmem:[%s6 + $0x2c] sm:$0xf]
        %v1409 = vld [vmem:[%s6 + $0x30] sm:$0xf]
        %v1410 = vld [vmem:[%s6 + $0x34] sm:$0xf]
        %v1411 = vld [vmem:[%s6 + $0x38] sm:$0xf]
        %v1412 = vld [vmem:[%s6 + $0x3c] sm:$0xf]
        %v1413 = vunpack.c.l.bf16 %v1397
        %v1414 = vunpack.c.l.bf16 %v1398
        %v1415 = vunpack.c.l.bf16 %v1399
        %v1416 = vunpack.c.l.bf16 %v1400
        %v1417 = vunpack.c.l.bf16 %v1401
        %v1418 = vunpack.c.l.bf16 %v1402
        %v1419 = vunpack.c.l.bf16 %v1403
        %v1420 = vunpack.c.l.bf16 %v1404
        %v1421 = vunpack.c.l.bf16 %v1405
        %v1422 = vunpack.c.l.bf16 %v1406
        %v1423 = vunpack.c.l.bf16 %v1407
        %v1424 = vunpack.c.l.bf16 %v1408
        %v1425 = vunpack.c.l.bf16 %v1409
        %v1426 = vunpack.c.l.bf16 %v1410
        %v1427 = vunpack.c.l.bf16 %v1411
        %v1428 = vunpack.c.l.bf16 %v1412
        %1430 = vset.pattern.permute.xlu0 0
        %1431 = vperm.xlu0 %1430, %v1413
        %v1432 = vpop.permute.xlu0 %1431
        %1435 = vset.pattern.permute.xlu0 0
        %1436 = vperm.xlu0 %1435, %v1414
        %v1437 = vpop.permute.xlu0 %1436
        %1440 = vset.pattern.permute.xlu0 0
        %1441 = vperm.xlu0 %1440, %v1415
        %v1442 = vpop.permute.xlu0 %1441
        %1445 = vset.pattern.permute.xlu0 0
        %1446 = vperm.xlu0 %1445, %v1416
        %v1447 = vpop.permute.xlu0 %1446
        %1450 = vset.pattern.permute.xlu0 0
        %1451 = vperm.xlu0 %1450, %v1417
        %v1452 = vpop.permute.xlu0 %1451
        %1455 = vset.pattern.permute.xlu0 0
        %1456 = vperm.xlu0 %1455, %v1418
        %v1457 = vpop.permute.xlu0 %1456
        %1460 = vset.pattern.permute.xlu0 0
        %1461 = vperm.xlu0 %1460, %v1419
        %v1462 = vpop.permute.xlu0 %1461
        %1465 = vset.pattern.permute.xlu0 0
        %1466 = vperm.xlu0 %1465, %v1420
        %v1467 = vpop.permute.xlu0 %1466
        %1470 = vset.pattern.permute.xlu0 0
        %1471 = vperm.xlu0 %1470, %v1421
        %v1472 = vpop.permute.xlu0 %1471
        %1475 = vset.pattern.permute.xlu0 0
        %1476 = vperm.xlu0 %1475, %v1422
        %v1477 = vpop.permute.xlu0 %1476
        %1480 = vset.pattern.permute.xlu0 0
        %1481 = vperm.xlu0 %1480, %v1423
        %v1482 = vpop.permute.xlu0 %1481
        %1485 = vset.pattern.permute.xlu0 0
        %1486 = vperm.xlu0 %1485, %v1424
        %v1487 = vpop.permute.xlu0 %1486
        %1490 = vset.pattern.permute.xlu0 0
        %1491 = vperm.xlu0 %1490, %v1425
        %v1492 = vpop.permute.xlu0 %1491
        %1495 = vset.pattern.permute.xlu0 0
        %1496 = vperm.xlu0 %1495, %v1426
        %v1497 = vpop.permute.xlu0 %1496
        %1500 = vset.pattern.permute.xlu0 0
        %1501 = vperm.xlu0 %1500, %v1427
        %v1502 = vpop.permute.xlu0 %1501
        %1505 = vset.pattern.permute.xlu0 0
        %1506 = vperm.xlu0 %1505, %v1428
        %v1507 = vpop.permute.xlu0 %1506
        %v1525 = vunpack.c.l.b16 %v1381
        %v1526 = vunpack.c.l.b16 %v1382
        %v1527 = vunpack.c.l.b16 %v1383
        %v1528 = vunpack.c.l.b16 %v1384
        %v1529 = vunpack.c.l.b16 %v1385
        %v1530 = vunpack.c.l.b16 %v1386
        %v1531 = vunpack.c.l.b16 %v1387
        %v1532 = vunpack.c.l.b16 %v1388
        %v1533 = vunpack.c.l.b16 %v1389
        %v1534 = vunpack.c.l.b16 %v1390
        %v1535 = vunpack.c.l.b16 %v1391
        %v1536 = vunpack.c.l.b16 %v1392
        %v1537 = vunpack.c.l.b16 %v1393
        %v1538 = vunpack.c.l.b16 %v1394
        %v1539 = vunpack.c.l.b16 %v1395
        %v1540 = vunpack.c.l.b16 %v1396
        %v1541 = vpack.c.b16 %v1526, %v1525
        %v1542 = vpack.c.b16 %v1528, %v1527
        %v1543 = vpack.c.b16 %v1530, %v1529
        %v1544 = vpack.c.b16 %v1532, %v1531
        %v1545 = vpack.c.b16 %v1534, %v1533
        %v1546 = vpack.c.b16 %v1536, %v1535
        %v1547 = vpack.c.b16 %v1538, %v1537
        %v1548 = vpack.c.b16 %v1540, %v1539
        %v1550 = vsel %vm734, %v1541, 0
        %v1553 = vsel %vm734, %v1542, 0
        %v1556 = vsel %vm734, %v1543, 0
        %v1559 = vsel %vm734, %v1544, 0
        %v1562 = vsel %vm734, %v1545, 0
        %v1565 = vsel %vm734, %v1546, 0
        %v1568 = vsel %vm734, %v1547, 0
        %v1571 = vsel %vm734, %v1548, 0
        %1573 = vmatprep.subr.bf16.mxu0 0
        %1574 = vmatpush1.bf16.msra.mxu0 %v1377
        %1575 = vmatprep.subr.bf16.mxu0 0
        %1576 = vmatpush1.bf16.msra.mxu0 %v1378
        %1577 = vmatprep.subr.bf16.mxu0 0
        %1578 = vmatpush1.bf16.msra.mxu0 %v1379
        %1579 = vmatprep.subr.bf16.mxu0 0
        %1580 = vmatpush1.bf16.msra.mxu0 %v1380
        %1581 = vmatprep.subr.bf16.mxu0 0
        %1582 = vmatpush1.bf16.msra.mxu0 0
        %1583 = vmatprep.subr.bf16.mxu0 0
        %1584 = vmatpush1.bf16.msra.mxu0 0
        %1585 = vmatprep.subr.bf16.mxu0 0
        %1586 = vmatpush1.bf16.msra.mxu0 0
        %1587 = vmatprep.subr.bf16.mxu0 0
        %1588 = vmatpush1.bf16.msra.mxu0 0
        %1589 = vmatprep.subr.bf16.mxu0 0
        %1590 = vmatpush1.bf16.msra.mxu0 0
        %1591 = vmatprep.subr.bf16.mxu0 0
        %1592 = vmatpush1.bf16.msra.mxu0 0
        %1593 = vmatprep.subr.bf16.mxu0 0
        %1594 = vmatpush1.bf16.msra.mxu0 0
        %1595 = vmatprep.subr.bf16.mxu0 0
        %1596 = vmatpush1.bf16.msra.mxu0 0
        %1597 = vmatprep.subr.bf16.mxu0 0
        %1598 = vmatpush1.bf16.msra.mxu0 0
        %1599 = vmatprep.subr.bf16.mxu0 0
        %1600 = vmatpush1.bf16.msra.mxu0 0
        %1601 = vmatprep.subr.bf16.mxu0 0
        %1602 = vmatpush1.bf16.msra.mxu0 0
        %1603 = vmatprep.subr.bf16.mxu0 0
        %1604 = vmatpush1.bf16.msra.mxu0 0
        %1605 = vmatprep.mubr.bf16.mxu0 0
        %1606 = vmatmul.mubr.bf16.gmra.mrb[0].mxu0 %v1550
        %v1607 = vpop.f32.mrb[0].mxu0
        %v1608 = vadd.f32 %v1432, %v1607
        %v1609 = vpop.f32.mrb[0].mxu0
        %v1610 = vpop.f32.mrb[0].mxu0
        %v1611 = vadd.f32 %v1437, %v1610
        %v1612 = vpop.f32.mrb[0].mxu0
        %1613 = vmatprep.mubr.bf16.mxu0 0
        %1614 = vmatmul.mubr.bf16.gmra.mrb[0].mxu0 %v1553
        %v1615 = vpop.f32.mrb[0].mxu0
        %v1616 = vadd.f32 %v1442, %v1615
        %v1617 = vpop.f32.mrb[0].mxu0
        %v1618 = vpop.f32.mrb[0].mxu0
        %v1619 = vadd.f32 %v1447, %v1618
        %v1620 = vpop.f32.mrb[0].mxu0
        %1621 = vmatprep.mubr.bf16.mxu0 0
        %1622 = vmatmul.mubr.bf16.gmra.mrb[0].mxu0 %v1556
        %v1623 = vpop.f32.mrb[0].mxu0
        %v1624 = vadd.f32 %v1452, %v1623
        %v1625 = vpop.f32.mrb[0].mxu0
        %v1626 = vpop.f32.mrb[0].mxu0
        %v1627 = vadd.f32 %v1457, %v1626
        %v1628 = vpop.f32.mrb[0].mxu0
        %1629 = vmatprep.mubr.bf16.mxu0 0
        %1630 = vmatmul.mubr.bf16.gmra.mrb[0].mxu0 %v1559
        %v1631 = vpop.f32.mrb[0].mxu0
        %v1632 = vadd.f32 %v1462, %v1631
        %v1633 = vpop.f32.mrb[0].mxu0
        %v1634 = vpop.f32.mrb[0].mxu0
        %v1635 = vadd.f32 %v1467, %v1634
        %v1636 = vpop.f32.mrb[0].mxu0
        %1637 = vmatprep.mubr.bf16.mxu0 0
        %1638 = vmatmul.mubr.bf16.gmra.mrb[0].mxu0 %v1562
        %v1639 = vpop.f32.mrb[0].mxu0
        %v1640 = vadd.f32 %v1472, %v1639
        %v1641 = vpop.f32.mrb[0].mxu0
        %v1642 = vpop.f32.mrb[0].mxu0
        %v1643 = vadd.f32 %v1477, %v1642
        %v1644 = vpop.f32.mrb[0].mxu0
        %1645 = vmatprep.mubr.bf16.mxu0 0
        %1646 = vmatmul.mubr.bf16.gmra.mrb[0].mxu0 %v1565
        %v1647 = vpop.f32.mrb[0].mxu0
        %v1648 = vadd.f32 %v1482, %v1647
        %v1649 = vpop.f32.mrb[0].mxu0
        %v1650 = vpop.f32.mrb[0].mxu0
        %v1651 = vadd.f32 %v1487, %v1650
        %v1652 = vpop.f32.mrb[0].mxu0
        %1653 = vmatprep.mubr.bf16.mxu0 0
        %1654 = vmatmul.mubr.bf16.gmra.mrb[0].mxu0 %v1568
        %v1655 = vpop.f32.mrb[0].mxu0
        %v1656 = vadd.f32 %v1492, %v1655
        %v1657 = vpop.f32.mrb[0].mxu0
        %v1658 = vpop.f32.mrb[0].mxu0
        %v1659 = vadd.f32 %v1497, %v1658
        %v1660 = vpop.f32.mrb[0].mxu0
        %1661 = vmatprep.mubr.bf16.mxu0 0
        %1662 = vmatmul.mubr.bf16.gmra.mrb[0].mxu0 %v1571
        %v1663 = vpop.f32.mrb[0].mxu0
        %v1664 = vadd.f32 %v1502, %v1663
        %v1665 = vpop.f32.mrb[0].mxu0
        %v1666 = vpop.f32.mrb[0].mxu0
        %v1667 = vadd.f32 %v1507, %v1666
        %v1668 = vpop.f32.mrb[0].mxu0
        %1669 = vdwg.mxu0
        %v1670 = vmul.f32 %v1608, 0.2
        %v1671 = vmul.f32 %v1611, 0.2
        %v1672 = vmul.f32 %v1616, 0.2
        %v1673 = vmul.f32 %v1619, 0.2
        %v1674 = vmul.f32 %v1624, 0.2
        %v1675 = vmul.f32 %v1627, 0.2
        %v1676 = vmul.f32 %v1632, 0.2
        %v1677 = vmul.f32 %v1635, 0.2
        %v1678 = vmul.f32 %v1640, 0.2
        %v1679 = vmul.f32 %v1643, 0.2
        %v1680 = vmul.f32 %v1648, 0.2
        %v1681 = vmul.f32 %v1651, 0.2
        %v1682 = vmul.f32 %v1656, 0.2
        %v1683 = vmul.f32 %v1659, 0.2
        %v1684 = vmul.f32 %v1664, 0.2
        %v1685 = vmul.f32 %v1667, 0.2
        %v1686 = vmax.f32 %v1608, %v1670
        %v1687 = vmax.f32 %v1611, %v1671
        %v1688 = vmax.f32 %v1616, %v1672
        %v1689 = vmax.f32 %v1619, %v1673
        %v1690 = vmax.f32 %v1624, %v1674
        %v1691 = vmax.f32 %v1627, %v1675
        %v1692 = vmax.f32 %v1632, %v1676
        %v1693 = vmax.f32 %v1635, %v1677
        %v1694 = vmax.f32 %v1640, %v1678
        %v1695 = vmax.f32 %v1643, %v1679
        %v1696 = vmax.f32 %v1648, %v1680
        %v1697 = vmax.f32 %v1651, %v1681
        %v1698 = vmax.f32 %v1656, %v1682
        %v1699 = vmax.f32 %v1659, %v1683
        %v1700 = vmax.f32 %v1664, %v1684
        %v1701 = vmax.f32 %v1667, %v1685
        %v1702 = vpack.c.bf16 %v1687, %v1686
        %v1703 = vpack.c.bf16 %v1689, %v1688
        %v1704 = vpack.c.bf16 %v1691, %v1690
        %v1705 = vpack.c.bf16 %v1693, %v1692
        %v1706 = vpack.c.bf16 %v1695, %v1694
        %v1707 = vpack.c.bf16 %v1697, %v1696
        %v1708 = vpack.c.bf16 %v1699, %v1698
        %v1709 = vpack.c.bf16 %v1701, %v1700
        %v1710 = vld [vmem:[%s7] sm:$0xf]
        %v1711 = vld [vmem:[%s7 + $0x4] sm:$0xf]
        %v1712 = vld [vmem:[%s7 + $0x8] sm:$0xf]
        %v1713 = vld [vmem:[%s7 + $0xc] sm:$0xf]
        %v1714 = vld [vmem:[%s7 + $0x10] sm:$0xf]
        %v1715 = vld [vmem:[%s7 + $0x14] sm:$0xf]
        %v1716 = vld [vmem:[%s7 + $0x18] sm:$0xf]
        %v1717 = vld [vmem:[%s7 + $0x1c] sm:$0xf]
        %v1718 = vld [vmem:[%s7 + $0x20] sm:$0xf]
        %v1719 = vld [vmem:[%s7 + $0x24] sm:$0xf]
        %v1720 = vld [vmem:[%s7 + $0x28] sm:$0xf]
        %v1721 = vld [vmem:[%s7 + $0x2c] sm:$0xf]
        %v1722 = vld [vmem:[%s7 + $0x30] sm:$0xf]
        %v1723 = vld [vmem:[%s7 + $0x34] sm:$0xf]
        %v1724 = vld [vmem:[%s7 + $0x38] sm:$0xf]
        %v1725 = vld [vmem:[%s7 + $0x3c] sm:$0xf]
        %v1726 = vld [vmem:[%s8] sm:$0xf]
        %v1727 = vld [vmem:[%s8 + $0x4] sm:$0xf]
        %v1728 = vld [vmem:[%s8 + $0x8] sm:$0xf]
        %v1729 = vld [vmem:[%s8 + $0xc] sm:$0xf]
        %v1730 = vld [vmem:[%s8 + $0x10] sm:$0xf]
        %v1731 = vld [vmem:[%s8 + $0x14] sm:$0xf]
        %v1732 = vld [vmem:[%s8 + $0x18] sm:$0xf]
        %v1733 = vld [vmem:[%s8 + $0x1c] sm:$0xf]
        %v1734 = vld [vmem:[%s8 + $0x20] sm:$0xf]
        %v1735 = vld [vmem:[%s8 + $0x24] sm:$0xf]
        %v1736 = vld [vmem:[%s8 + $0x28] sm:$0xf]
        %v1737 = vld [vmem:[%s8 + $0x2c] sm:$0xf]
        %v1738 = vld [vmem:[%s8 + $0x30] sm:$0xf]
        %v1739 = vld [vmem:[%s8 + $0x34] sm:$0xf]
        %v1740 = vld [vmem:[%s8 + $0x38] sm:$0xf]
        %v1741 = vld [vmem:[%s8 + $0x3c] sm:$0xf]
        %v1742 = vunpack.c.l.bf16 %v1726
        %v1743 = vunpack.c.l.bf16 %v1727
        %v1744 = vunpack.c.l.bf16 %v1728
        %v1745 = vunpack.c.l.bf16 %v1729
        %v1746 = vunpack.c.l.bf16 %v1730
        %v1747 = vunpack.c.l.bf16 %v1731
        %v1748 = vunpack.c.l.bf16 %v1732
        %v1749 = vunpack.c.l.bf16 %v1733
        %v1750 = vunpack.c.l.bf16 %v1734
        %v1751 = vunpack.c.l.bf16 %v1735
        %v1752 = vunpack.c.l.bf16 %v1736
        %v1753 = vunpack.c.l.bf16 %v1737
        %v1754 = vunpack.c.l.bf16 %v1738
        %v1755 = vunpack.c.l.bf16 %v1739
        %v1756 = vunpack.c.l.bf16 %v1740
        %v1757 = vunpack.c.l.bf16 %v1741
        %1759 = vset.pattern.permute.xlu0 0
        %1760 = vperm.xlu0 %1759, %v1742
        %v1761 = vpop.permute.xlu0 %1760
        %1764 = vset.pattern.permute.xlu0 0
        %1765 = vperm.xlu0 %1764, %v1743
        %v1766 = vpop.permute.xlu0 %1765
        %1769 = vset.pattern.permute.xlu0 0
        %1770 = vperm.xlu0 %1769, %v1744
        %v1771 = vpop.permute.xlu0 %1770
        %1774 = vset.pattern.permute.xlu0 0
        %1775 = vperm.xlu0 %1774, %v1745
        %v1776 = vpop.permute.xlu0 %1775
        %1779 = vset.pattern.permute.xlu0 0
        %1780 = vperm.xlu0 %1779, %v1746
        %v1781 = vpop.permute.xlu0 %1780
        %1784 = vset.pattern.permute.xlu0 0
        %1785 = vperm.xlu0 %1784, %v1747
        %v1786 = vpop.permute.xlu0 %1785
        %1789 = vset.pattern.permute.xlu0 0
        %1790 = vperm.xlu0 %1789, %v1748
        %v1791 = vpop.permute.xlu0 %1790
        %1794 = vset.pattern.permute.xlu0 0
        %1795 = vperm.xlu0 %1794, %v1749
        %v1796 = vpop.permute.xlu0 %1795
        %1799 = vset.pattern.permute.xlu0 0
        %1800 = vperm.xlu0 %1799, %v1750
        %v1801 = vpop.permute.xlu0 %1800
        %1804 = vset.pattern.permute.xlu0 0
        %1805 = vperm.xlu0 %1804, %v1751
        %v1806 = vpop.permute.xlu0 %1805
        %1809 = vset.pattern.permute.xlu0 0
        %1810 = vperm.xlu0 %1809, %v1752
        %v1811 = vpop.permute.xlu0 %1810
        %1814 = vset.pattern.permute.xlu0 0
        %1815 = vperm.xlu0 %1814, %v1753
        %v1816 = vpop.permute.xlu0 %1815
        %1819 = vset.pattern.permute.xlu0 0
        %1820 = vperm.xlu0 %1819, %v1754
        %v1821 = vpop.permute.xlu0 %1820
        %1824 = vset.pattern.permute.xlu0 0
        %1825 = vperm.xlu0 %1824, %v1755
        %v1826 = vpop.permute.xlu0 %1825
        %1829 = vset.pattern.permute.xlu0 0
        %1830 = vperm.xlu0 %1829, %v1756
        %v1831 = vpop.permute.xlu0 %1830
        %1834 = vset.pattern.permute.xlu0 0
        %1835 = vperm.xlu0 %1834, %v1757
        %v1836 = vpop.permute.xlu0 %1835
        %v1854 = vunpack.c.l.b16 %v1710
        %v1855 = vunpack.c.l.b16 %v1711
        %v1856 = vunpack.c.l.b16 %v1712
        %v1857 = vunpack.c.l.b16 %v1713
        %v1858 = vunpack.c.l.b16 %v1714
        %v1859 = vunpack.c.l.b16 %v1715
        %v1860 = vunpack.c.l.b16 %v1716
        %v1861 = vunpack.c.l.b16 %v1717
        %v1862 = vunpack.c.l.b16 %v1718
        %v1863 = vunpack.c.l.b16 %v1719
        %v1864 = vunpack.c.l.b16 %v1720
        %v1865 = vunpack.c.l.b16 %v1721
        %v1866 = vunpack.c.l.b16 %v1722
        %v1867 = vunpack.c.l.b16 %v1723
        %v1868 = vunpack.c.l.b16 %v1724
        %v1869 = vunpack.c.l.b16 %v1725
        %v1870 = vpack.c.b16 %v1855, %v1854
        %v1871 = vpack.c.b16 %v1857, %v1856
        %v1872 = vpack.c.b16 %v1859, %v1858
        %v1873 = vpack.c.b16 %v1861, %v1860
        %v1874 = vpack.c.b16 %v1863, %v1862
        %v1875 = vpack.c.b16 %v1865, %v1864
        %v1876 = vpack.c.b16 %v1867, %v1866
        %v1877 = vpack.c.b16 %v1869, %v1868
        %1886 = vmatprep.subr.bf16.mxu0 0
        %1887 = vmatpush1.bf16.msra.mxu0 %v1702
        %1888 = vmatprep.subr.bf16.mxu0 0
        %1889 = vmatpush1.bf16.msra.mxu0 %v1703
        %1890 = vmatprep.subr.bf16.mxu0 0
        %1891 = vmatpush1.bf16.msra.mxu0 %v1704
        %1892 = vmatprep.subr.bf16.mxu0 0
        %1893 = vmatpush1.bf16.msra.mxu0 %v1705
        %1894 = vmatprep.subr.bf16.mxu0 0
        %1895 = vmatpush1.bf16.msra.mxu0 %v1706
        %1896 = vmatprep.subr.bf16.mxu0 0
        %1897 = vmatpush1.bf16.msra.mxu0 %v1707
        %1898 = vmatprep.subr.bf16.mxu0 0
        %1899 = vmatpush1.bf16.msra.mxu0 %v1708
        %1900 = vmatprep.subr.bf16.mxu0 0
        %1901 = vmatpush1.bf16.msra.mxu0 %v1709
        %1902 = vmatprep.subr.bf16.mxu0 0
        %1903 = vmatpush1.bf16.msra.mxu0 0
        %1904 = vmatprep.subr.bf16.mxu0 0
        %1905 = vmatpush1.bf16.msra.mxu0 0
        %1906 = vmatprep.subr.bf16.mxu0 0
        %1907 = vmatpush1.bf16.msra.mxu0 0
        %1908 = vmatprep.subr.bf16.mxu0 0
        %1909 = vmatpush1.bf16.msra.mxu0 0
        %1910 = vmatprep.subr.bf16.mxu0 0
        %1911 = vmatpush1.bf16.msra.mxu0 0
        %1912 = vmatprep.subr.bf16.mxu0 0
        %1913 = vmatpush1.bf16.msra.mxu0 0
        %1914 = vmatprep.subr.bf16.mxu0 0
        %1915 = vmatpush1.bf16.msra.mxu0 0
        %1916 = vmatprep.subr.bf16.mxu0 0
        %1917 = vmatpush1.bf16.msra.mxu0 0
        %1918 = vmatprep.mubr.bf16.mxu0 0
        %1919 = vmatmul.mubr.bf16.gmra.mrb[0].mxu0 %v1870
        %v1920 = vpop.f32.mrb[0].mxu0
        %v1921 = vadd.f32 %v1761, %v1920
        %v1922 = vpop.f32.mrb[0].mxu0
        %v1923 = vpop.f32.mrb[0].mxu0
        %v1924 = vadd.f32 %v1766, %v1923
        %v1925 = vpop.f32.mrb[0].mxu0
        %1926 = vmatprep.mubr.bf16.mxu0 0
        %1927 = vmatmul.mubr.bf16.gmra.mrb[0].mxu0 %v1871
        %v1928 = vpop.f32.mrb[0].mxu0
        %v1929 = vadd.f32 %v1771, %v1928
        %v1930 = vpop.f32.mrb[0].mxu0
        %v1931 = vpop.f32.mrb[0].mxu0
        %v1932 = vadd.f32 %v1776, %v1931
        %v1933 = vpop.f32.mrb[0].mxu0
        %1934 = vmatprep.mubr.bf16.mxu0 0
        %1935 = vmatmul.mubr.bf16.gmra.mrb[0].mxu0 %v1872
        %v1936 = vpop.f32.mrb[0].mxu0
        %v1937 = vadd.f32 %v1781, %v1936
        %v1938 = vpop.f32.mrb[0].mxu0
        %v1939 = vpop.f32.mrb[0].mxu0
        %v1940 = vadd.f32 %v1786, %v1939
        %v1941 = vpop.f32.mrb[0].mxu0
        %1942 = vmatprep.mubr.bf16.mxu0 0
        %1943 = vmatmul.mubr.bf16.gmra.mrb[0].mxu0 %v1873
        %v1944 = vpop.f32.mrb[0].mxu0
        %v1945 = vadd.f32 %v1791, %v1944
        %v1946 = vpop.f32.mrb[0].mxu0
        %v1947 = vpop.f32.mrb[0].mxu0
        %v1948 = vadd.f32 %v1796, %v1947
        %v1949 = vpop.f32.mrb[0].mxu0
        %1950 = vmatprep.mubr.bf16.mxu0 0
        %1951 = vmatmul.mubr.bf16.gmra.mrb[0].mxu0 %v1874
        %v1952 = vpop.f32.mrb[0].mxu0
        %v1953 = vadd.f32 %v1801, %v1952
        %v1954 = vpop.f32.mrb[0].mxu0
        %v1955 = vpop.f32.mrb[0].mxu0
        %v1956 = vadd.f32 %v1806, %v1955
        %v1957 = vpop.f32.mrb[0].mxu0
        %1958 = vmatprep.mubr.bf16.mxu0 0
        %1959 = vmatmul.mubr.bf16.gmra.mrb[0].mxu0 %v1875
        %v1960 = vpop.f32.mrb[0].mxu0
        %v1961 = vadd.f32 %v1811, %v1960
        %v1962 = vpop.f32.mrb[0].mxu0
        %v1963 = vpop.f32.mrb[0].mxu0
        %v1964 = vadd.f32 %v1816, %v1963
        %v1965 = vpop.f32.mrb[0].mxu0
        %1966 = vmatprep.mubr.bf16.mxu0 0
        %1967 = vmatmul.mubr.bf16.gmra.mrb[0].mxu0 %v1876
        %v1968 = vpop.f32.mrb[0].mxu0
        %v1969 = vadd.f32 %v1821, %v1968
        %v1970 = vpop.f32.mrb[0].mxu0
        %v1971 = vpop.f32.mrb[0].mxu0
        %v1972 = vadd.f32 %v1826, %v1971
        %v1973 = vpop.f32.mrb[0].mxu0
        %1974 = vmatprep.mubr.bf16.mxu0 0
        %1975 = vmatmul.mubr.bf16.gmra.mrb[0].mxu0 %v1877
        %v1976 = vpop.f32.mrb[0].mxu0
        %v1977 = vadd.f32 %v1831, %v1976
        %v1978 = vpop.f32.mrb[0].mxu0
        %v1979 = vpop.f32.mrb[0].mxu0
        %v1980 = vadd.f32 %v1836, %v1979
        %v1981 = vpop.f32.mrb[0].mxu0
        %1982 = vdwg.mxu0
        %v1983 = vmul.f32 %v1921, 0.2
        %v1984 = vmul.f32 %v1924, 0.2
        %v1985 = vmul.f32 %v1929, 0.2
        %v1986 = vmul.f32 %v1932, 0.2
        %v1987 = vmul.f32 %v1937, 0.2
        %v1988 = vmul.f32 %v1940, 0.2
        %v1989 = vmul.f32 %v1945, 0.2
        %v1990 = vmul.f32 %v1948, 0.2
        %v1991 = vmul.f32 %v1953, 0.2
        %v1992 = vmul.f32 %v1956, 0.2
        %v1993 = vmul.f32 %v1961, 0.2
        %v1994 = vmul.f32 %v1964, 0.2
        %v1995 = vmul.f32 %v1969, 0.2
        %v1996 = vmul.f32 %v1972, 0.2
        %v1997 = vmul.f32 %v1977, 0.2
        %v1998 = vmul.f32 %v1980, 0.2
        %v1999 = vmax.f32 %v1921, %v1983
        %v2000 = vmax.f32 %v1924, %v1984
        %v2001 = vmax.f32 %v1929, %v1985
        %v2002 = vmax.f32 %v1932, %v1986
        %v2003 = vmax.f32 %v1937, %v1987
        %v2004 = vmax.f32 %v1940, %v1988
        %v2005 = vmax.f32 %v1945, %v1989
        %v2006 = vmax.f32 %v1948, %v1990
        %v2007 = vmax.f32 %v1953, %v1991
        %v2008 = vmax.f32 %v1956, %v1992
        %v2009 = vmax.f32 %v1961, %v1993
        %v2010 = vmax.f32 %v1964, %v1994
        %v2011 = vmax.f32 %v1969, %v1995
        %v2012 = vmax.f32 %v1972, %v1996
        %v2013 = vmax.f32 %v1977, %v1997
        %v2014 = vmax.f32 %v1980, %v1998
        %v2015 = vpack.c.bf16 %v2000, %v1999
        %v2016 = vpack.c.bf16 %v2002, %v2001
        %v2017 = vpack.c.bf16 %v2004, %v2003
        %v2018 = vpack.c.bf16 %v2006, %v2005
        %v2019 = vpack.c.bf16 %v2008, %v2007
        %v2020 = vpack.c.bf16 %v2010, %v2009
        %v2021 = vpack.c.bf16 %v2012, %v2011
        %v2022 = vpack.c.bf16 %v2014, %v2013
        %s2023 = scalar_lea.vmem %s7, 64
        %v2024 = vld [vmem:[%s2023] sm:$0xf]
        %v2025 = vld [vmem:[%s2023 + $0x4] sm:$0xf]
        %v2026 = vld [vmem:[%s2023 + $0x8] sm:$0xf]
        %v2027 = vld [vmem:[%s2023 + $0xc] sm:$0xf]
        %v2028 = vld [vmem:[%s2023 + $0x10] sm:$0xf]
        %v2029 = vld [vmem:[%s2023 + $0x14] sm:$0xf]
        %v2030 = vld [vmem:[%s2023 + $0x18] sm:$0xf]
        %v2031 = vld [vmem:[%s2023 + $0x1c] sm:$0xf]
        %v2032 = vld [vmem:[%s2023 + $0x20] sm:$0xf]
        %v2033 = vld [vmem:[%s2023 + $0x24] sm:$0xf]
        %v2034 = vld [vmem:[%s2023 + $0x28] sm:$0xf]
        %v2035 = vld [vmem:[%s2023 + $0x2c] sm:$0xf]
        %v2036 = vld [vmem:[%s2023 + $0x30] sm:$0xf]
        %v2037 = vld [vmem:[%s2023 + $0x34] sm:$0xf]
        %v2038 = vld [vmem:[%s2023 + $0x38] sm:$0xf]
        %v2039 = vld [vmem:[%s2023 + $0x3c] sm:$0xf]
        %s2040 = scalar_lea.vmem %s8, 64
        %v2041 = vld [vmem:[%s2040] sm:$0xf]
        %v2042 = vld [vmem:[%s2040 + $0x4] sm:$0xf]
        %v2043 = vld [vmem:[%s2040 + $0x8] sm:$0xf]
        %v2044 = vld [vmem:[%s2040 + $0xc] sm:$0xf]
        %v2045 = vld [vmem:[%s2040 + $0x10] sm:$0xf]
        %v2046 = vld [vmem:[%s2040 + $0x14] sm:$0xf]
        %v2047 = vld [vmem:[%s2040 + $0x18] sm:$0xf]
        %v2048 = vld [vmem:[%s2040 + $0x1c] sm:$0xf]
        %v2049 = vld [vmem:[%s2040 + $0x20] sm:$0xf]
        %v2050 = vld [vmem:[%s2040 + $0x24] sm:$0xf]
        %v2051 = vld [vmem:[%s2040 + $0x28] sm:$0xf]
        %v2052 = vld [vmem:[%s2040 + $0x2c] sm:$0xf]
        %v2053 = vld [vmem:[%s2040 + $0x30] sm:$0xf]
        %v2054 = vld [vmem:[%s2040 + $0x34] sm:$0xf]
        %v2055 = vld [vmem:[%s2040 + $0x38] sm:$0xf]
        %v2056 = vld [vmem:[%s2040 + $0x3c] sm:$0xf]
        %v2057 = vunpack.c.l.bf16 %v2041
        %v2058 = vunpack.c.l.bf16 %v2042
        %v2059 = vunpack.c.l.bf16 %v2043
        %v2060 = vunpack.c.l.bf16 %v2044
        %v2061 = vunpack.c.l.bf16 %v2045
        %v2062 = vunpack.c.l.bf16 %v2046
        %v2063 = vunpack.c.l.bf16 %v2047
        %v2064 = vunpack.c.l.bf16 %v2048
        %v2065 = vunpack.c.l.bf16 %v2049
        %v2066 = vunpack.c.l.bf16 %v2050
        %v2067 = vunpack.c.l.bf16 %v2051
        %v2068 = vunpack.c.l.bf16 %v2052
        %v2069 = vunpack.c.l.bf16 %v2053
        %v2070 = vunpack.c.l.bf16 %v2054
        %v2071 = vunpack.c.l.bf16 %v2055
        %v2072 = vunpack.c.l.bf16 %v2056
        %2074 = vset.pattern.permute.xlu0 0
        %2075 = vperm.xlu0 %2074, %v2057
        %v2076 = vpop.permute.xlu0 %2075
        %2079 = vset.pattern.permute.xlu0 0
        %2080 = vperm.xlu0 %2079, %v2058
        %v2081 = vpop.permute.xlu0 %2080
        %2084 = vset.pattern.permute.xlu0 0
        %2085 = vperm.xlu0 %2084, %v2059
        %v2086 = vpop.permute.xlu0 %2085
        %2089 = vset.pattern.permute.xlu0 0
        %2090 = vperm.xlu0 %2089, %v2060
        %v2091 = vpop.permute.xlu0 %2090
        %2094 = vset.pattern.permute.xlu0 0
        %2095 = vperm.xlu0 %2094, %v2061
        %v2096 = vpop.permute.xlu0 %2095
        %2099 = vset.pattern.permute.xlu0 0
        %2100 = vperm.xlu0 %2099, %v2062
        %v2101 = vpop.permute.xlu0 %2100
        %2104 = vset.pattern.permute.xlu0 0
        %2105 = vperm.xlu0 %2104, %v2063
        %v2106 = vpop.permute.xlu0 %2105
        %2109 = vset.pattern.permute.xlu0 0
        %2110 = vperm.xlu0 %2109, %v2064
        %v2111 = vpop.permute.xlu0 %2110
        %2114 = vset.pattern.permute.xlu0 0
        %2115 = vperm.xlu0 %2114, %v2065
        %v2116 = vpop.permute.xlu0 %2115
        %2119 = vset.pattern.permute.xlu0 0
        %2120 = vperm.xlu0 %2119, %v2066
        %v2121 = vpop.permute.xlu0 %2120
        %2124 = vset.pattern.permute.xlu0 0
        %2125 = vperm.xlu0 %2124, %v2067
        %v2126 = vpop.permute.xlu0 %2125
        %2129 = vset.pattern.permute.xlu0 0
        %2130 = vperm.xlu0 %2129, %v2068
        %v2131 = vpop.permute.xlu0 %2130
        %2134 = vset.pattern.permute.xlu0 0
        %2135 = vperm.xlu0 %2134, %v2069
        %v2136 = vpop.permute.xlu0 %2135
        %2139 = vset.pattern.permute.xlu0 0
        %2140 = vperm.xlu0 %2139, %v2070
        %v2141 = vpop.permute.xlu0 %2140
        %2144 = vset.pattern.permute.xlu0 0
        %2145 = vperm.xlu0 %2144, %v2071
        %v2146 = vpop.permute.xlu0 %2145
        %2149 = vset.pattern.permute.xlu0 0
        %2150 = vperm.xlu0 %2149, %v2072
        %v2151 = vpop.permute.xlu0 %2150
        %v2169 = vunpack.c.l.b16 %v2024
        %v2170 = vunpack.c.l.b16 %v2025
        %v2171 = vunpack.c.l.b16 %v2026
        %v2172 = vunpack.c.l.b16 %v2027
        %v2173 = vunpack.c.l.b16 %v2028
        %v2174 = vunpack.c.l.b16 %v2029
        %v2175 = vunpack.c.l.b16 %v2030
        %v2176 = vunpack.c.l.b16 %v2031
        %v2177 = vunpack.c.l.b16 %v2032
        %v2178 = vunpack.c.l.b16 %v2033
        %v2179 = vunpack.c.l.b16 %v2034
        %v2180 = vunpack.c.l.b16 %v2035
        %v2181 = vunpack.c.l.b16 %v2036
        %v2182 = vunpack.c.l.b16 %v2037
        %v2183 = vunpack.c.l.b16 %v2038
        %v2184 = vunpack.c.l.b16 %v2039
        %v2185 = vpack.c.b16 %v2170, %v2169
        %v2186 = vpack.c.b16 %v2172, %v2171
        %v2187 = vpack.c.b16 %v2174, %v2173
        %v2188 = vpack.c.b16 %v2176, %v2175
        %v2189 = vpack.c.b16 %v2178, %v2177
        %v2190 = vpack.c.b16 %v2180, %v2179
        %v2191 = vpack.c.b16 %v2182, %v2181
        %v2192 = vpack.c.b16 %v2184, %v2183
        %2201 = vmatprep.subr.bf16.mxu0 0
        %2202 = vmatpush1.bf16.msra.mxu0 %v2015
        %2203 = vmatprep.subr.bf16.mxu0 0
        %2204 = vmatpush1.bf16.msra.mxu0 %v2016
        %2205 = vmatprep.subr.bf16.mxu0 0
        %2206 = vmatpush1.bf16.msra.mxu0 %v2017
        %2207 = vmatprep.subr.bf16.mxu0 0
        %2208 = vmatpush1.bf16.msra.mxu0 %v2018
        %2209 = vmatprep.subr.bf16.mxu0 0
        %2210 = vmatpush1.bf16.msra.mxu0 %v2019
        %2211 = vmatprep.subr.bf16.mxu0 0
        %2212 = vmatpush1.bf16.msra.mxu0 %v2020
        %2213 = vmatprep.subr.bf16.mxu0 0
        %2214 = vmatpush1.bf16.msra.mxu0 %v2021
        %2215 = vmatprep.subr.bf16.mxu0 0
        %2216 = vmatpush1.bf16.msra.mxu0 %v2022
        %2217 = vmatprep.subr.bf16.mxu0 0
        %2218 = vmatpush1.bf16.msra.mxu0 0
        %2219 = vmatprep.subr.bf16.mxu0 0
        %2220 = vmatpush1.bf16.msra.mxu0 0
        %2221 = vmatprep.subr.bf16.mxu0 0
        %2222 = vmatpush1.bf16.msra.mxu0 0
        %2223 = vmatprep.subr.bf16.mxu0 0
        %2224 = vmatpush1.bf16.msra.mxu0 0
        %2225 = vmatprep.subr.bf16.mxu0 0
        %2226 = vmatpush1.bf16.msra.mxu0 0
        %2227 = vmatprep.subr.bf16.mxu0 0
        %2228 = vmatpush1.bf16.msra.mxu0 0
        %2229 = vmatprep.subr.bf16.mxu0 0
        %2230 = vmatpush1.bf16.msra.mxu0 0
        %2231 = vmatprep.subr.bf16.mxu0 0
        %2232 = vmatpush1.bf16.msra.mxu0 0
        %2233 = vmatprep.mubr.bf16.mxu0 0
        %2234 = vmatmul.mubr.bf16.gmra.mrb[0].mxu0 %v2185
        %v2235 = vpop.f32.mrb[0].mxu0
        %v2236 = vadd.f32 %v2076, %v2235
        %v2237 = vpop.f32.mrb[0].mxu0
        %v2238 = vpop.f32.mrb[0].mxu0
        %v2239 = vadd.f32 %v2081, %v2238
        %v2240 = vpop.f32.mrb[0].mxu0
        %2241 = vmatprep.mubr.bf16.mxu0 0
        %2242 = vmatmul.mubr.bf16.gmra.mrb[0].mxu0 %v2186
        %v2243 = vpop.f32.mrb[0].mxu0
        %v2244 = vadd.f32 %v2086, %v2243
        %v2245 = vpop.f32.mrb[0].mxu0
        %v2246 = vpop.f32.mrb[0].mxu0
        %v2247 = vadd.f32 %v2091, %v2246
        %v2248 = vpop.f32.mrb[0].mxu0
        %2249 = vmatprep.mubr.bf16.mxu0 0
        %2250 = vmatmul.mubr.bf16.gmra.mrb[0].mxu0 %v2187
        %v2251 = vpop.f32.mrb[0].mxu0
        %v2252 = vadd.f32 %v2096, %v2251
        %v2253 = vpop.f32.mrb[0].mxu0
        %v2254 = vpop.f32.mrb[0].mxu0
        %v2255 = vadd.f32 %v2101, %v2254
        %v2256 = vpop.f32.mrb[0].mxu0
        %2257 = vmatprep.mubr.bf16.mxu0 0
        %2258 = vmatmul.mubr.bf16.gmra.mrb[0].mxu0 %v2188
        %v2259 = vpop.f32.mrb[0].mxu0
        %v2260 = vadd.f32 %v2106, %v2259
        %v2261 = vpop.f32.mrb[0].mxu0
        %v2262 = vpop.f32.mrb[0].mxu0
        %v2263 = vadd.f32 %v2111, %v2262
        %v2264 = vpop.f32.mrb[0].mxu0
        %2265 = vmatprep.mubr.bf16.mxu0 0
        %2266 = vmatmul.mubr.bf16.gmra.mrb[0].mxu0 %v2189
        %v2267 = vpop.f32.mrb[0].mxu0
        %v2268 = vadd.f32 %v2116, %v2267
        %v2269 = vpop.f32.mrb[0].mxu0
        %v2270 = vpop.f32.mrb[0].mxu0
        %v2271 = vadd.f32 %v2121, %v2270
        %v2272 = vpop.f32.mrb[0].mxu0
        %2273 = vmatprep.mubr.bf16.mxu0 0
        %2274 = vmatmul.mubr.bf16.gmra.mrb[0].mxu0 %v2190
        %v2275 = vpop.f32.mrb[0].mxu0
        %v2276 = vadd.f32 %v2126, %v2275
        %v2277 = vpop.f32.mrb[0].mxu0
        %v2278 = vpop.f32.mrb[0].mxu0
        %v2279 = vadd.f32 %v2131, %v2278
        %v2280 = vpop.f32.mrb[0].mxu0
        %2281 = vmatprep.mubr.bf16.mxu0 0
        %2282 = vmatmul.mubr.bf16.gmra.mrb[0].mxu0 %v2191
        %v2283 = vpop.f32.mrb[0].mxu0
        %v2284 = vadd.f32 %v2136, %v2283
        %v2285 = vpop.f32.mrb[0].mxu0
        %v2286 = vpop.f32.mrb[0].mxu0
        %v2287 = vadd.f32 %v2141, %v2286
        %v2288 = vpop.f32.mrb[0].mxu0
        %2289 = vmatprep.mubr.bf16.mxu0 0
        %2290 = vmatmul.mubr.bf16.gmra.mrb[0].mxu0 %v2192
        %v2291 = vpop.f32.mrb[0].mxu0
        %v2292 = vadd.f32 %v2146, %v2291
        %v2293 = vpop.f32.mrb[0].mxu0
        %v2294 = vpop.f32.mrb[0].mxu0
        %v2295 = vadd.f32 %v2151, %v2294
        %v2296 = vpop.f32.mrb[0].mxu0
        %2297 = vdwg.mxu0
        %v2298 = vmul.f32 %v2236, 0.2
        %v2299 = vmul.f32 %v2239, 0.2
        %v2300 = vmul.f32 %v2244, 0.2
        %v2301 = vmul.f32 %v2247, 0.2
        %v2302 = vmul.f32 %v2252, 0.2
        %v2303 = vmul.f32 %v2255, 0.2
        %v2304 = vmul.f32 %v2260, 0.2
        %v2305 = vmul.f32 %v2263, 0.2
        %v2306 = vmul.f32 %v2268, 0.2
        %v2307 = vmul.f32 %v2271, 0.2
        %v2308 = vmul.f32 %v2276, 0.2
        %v2309 = vmul.f32 %v2279, 0.2
        %v2310 = vmul.f32 %v2284, 0.2
        %v2311 = vmul.f32 %v2287, 0.2
        %v2312 = vmul.f32 %v2292, 0.2
        %v2313 = vmul.f32 %v2295, 0.2
        %v2314 = vmax.f32 %v2236, %v2298
        %v2315 = vmax.f32 %v2239, %v2299
        %v2316 = vmax.f32 %v2244, %v2300
        %v2317 = vmax.f32 %v2247, %v2301
        %v2318 = vmax.f32 %v2252, %v2302
        %v2319 = vmax.f32 %v2255, %v2303
        %v2320 = vmax.f32 %v2260, %v2304
        %v2321 = vmax.f32 %v2263, %v2305
        %v2322 = vmax.f32 %v2268, %v2306
        %v2323 = vmax.f32 %v2271, %v2307
        %v2324 = vmax.f32 %v2276, %v2308
        %v2325 = vmax.f32 %v2279, %v2309
        %v2326 = vmax.f32 %v2284, %v2310
        %v2327 = vmax.f32 %v2287, %v2311
        %v2328 = vmax.f32 %v2292, %v2312
        %v2329 = vmax.f32 %v2295, %v2313
        %v2330 = vpack.c.bf16 %v2315, %v2314
        %v2331 = vpack.c.bf16 %v2317, %v2316
        %v2332 = vpack.c.bf16 %v2319, %v2318
        %v2333 = vpack.c.bf16 %v2321, %v2320
        %v2334 = vpack.c.bf16 %v2323, %v2322
        %v2335 = vpack.c.bf16 %v2325, %v2324
        %v2336 = vpack.c.bf16 %v2327, %v2326
        %v2337 = vpack.c.bf16 %v2329, %v2328
        %s2338 = scalar_lea.vmem %s7, 128
        %v2339 = vld [vmem:[%s2338] sm:$0xf]
        %v2340 = vld [vmem:[%s2338 + $0x4] sm:$0xf]
        %v2341 = vld [vmem:[%s2338 + $0x8] sm:$0xf]
        %v2342 = vld [vmem:[%s2338 + $0xc] sm:$0xf]
        %v2343 = vld [vmem:[%s2338 + $0x10] sm:$0xf]
        %v2344 = vld [vmem:[%s2338 + $0x14] sm:$0xf]
        %v2345 = vld [vmem:[%s2338 + $0x18] sm:$0xf]
        %v2346 = vld [vmem:[%s2338 + $0x1c] sm:$0xf]
        %v2347 = vld [vmem:[%s2338 + $0x20] sm:$0xf]
        %v2348 = vld [vmem:[%s2338 + $0x24] sm:$0xf]
        %v2349 = vld [vmem:[%s2338 + $0x28] sm:$0xf]
        %v2350 = vld [vmem:[%s2338 + $0x2c] sm:$0xf]
        %v2351 = vld [vmem:[%s2338 + $0x30] sm:$0xf]
        %v2352 = vld [vmem:[%s2338 + $0x34] sm:$0xf]
        %v2353 = vld [vmem:[%s2338 + $0x38] sm:$0xf]
        %v2354 = vld [vmem:[%s2338 + $0x3c] sm:$0xf]
        %s2355 = scalar_lea.vmem %s8, 128
        %v2356 = vld [vmem:[%s2355] sm:$0xf]
        %v2357 = vld [vmem:[%s2355 + $0x4] sm:$0xf]
        %v2358 = vld [vmem:[%s2355 + $0x8] sm:$0xf]
        %v2359 = vld [vmem:[%s2355 + $0xc] sm:$0xf]
        %v2360 = vld [vmem:[%s2355 + $0x10] sm:$0xf]
        %v2361 = vld [vmem:[%s2355 + $0x14] sm:$0xf]
        %v2362 = vld [vmem:[%s2355 + $0x18] sm:$0xf]
        %v2363 = vld [vmem:[%s2355 + $0x1c] sm:$0xf]
        %v2364 = vld [vmem:[%s2355 + $0x20] sm:$0xf]
        %v2365 = vld [vmem:[%s2355 + $0x24] sm:$0xf]
        %v2366 = vld [vmem:[%s2355 + $0x28] sm:$0xf]
        %v2367 = vld [vmem:[%s2355 + $0x2c] sm:$0xf]
        %v2368 = vld [vmem:[%s2355 + $0x30] sm:$0xf]
        %v2369 = vld [vmem:[%s2355 + $0x34] sm:$0xf]
        %v2370 = vld [vmem:[%s2355 + $0x38] sm:$0xf]
        %v2371 = vld [vmem:[%s2355 + $0x3c] sm:$0xf]
        %v2372 = vunpack.c.l.bf16 %v2356
        %v2373 = vunpack.c.l.bf16 %v2357
        %v2374 = vunpack.c.l.bf16 %v2358
        %v2375 = vunpack.c.l.bf16 %v2359
        %v2376 = vunpack.c.l.bf16 %v2360
        %v2377 = vunpack.c.l.bf16 %v2361
        %v2378 = vunpack.c.l.bf16 %v2362
        %v2379 = vunpack.c.l.bf16 %v2363
        %v2380 = vunpack.c.l.bf16 %v2364
        %v2381 = vunpack.c.l.bf16 %v2365
        %v2382 = vunpack.c.l.bf16 %v2366
        %v2383 = vunpack.c.l.bf16 %v2367
        %v2384 = vunpack.c.l.bf16 %v2368
        %v2385 = vunpack.c.l.bf16 %v2369
        %v2386 = vunpack.c.l.bf16 %v2370
        %v2387 = vunpack.c.l.bf16 %v2371
        %2389 = vset.pattern.permute.xlu0 0
        %2390 = vperm.xlu0 %2389, %v2372
        %v2391 = vpop.permute.xlu0 %2390
        %2394 = vset.pattern.permute.xlu0 0
        %2395 = vperm.xlu0 %2394, %v2373
        %v2396 = vpop.permute.xlu0 %2395
        %2399 = vset.pattern.permute.xlu0 0
        %2400 = vperm.xlu0 %2399, %v2374
        %v2401 = vpop.permute.xlu0 %2400
        %2404 = vset.pattern.permute.xlu0 0
        %2405 = vperm.xlu0 %2404, %v2375
        %v2406 = vpop.permute.xlu0 %2405
        %2409 = vset.pattern.permute.xlu0 0
        %2410 = vperm.xlu0 %2409, %v2376
        %v2411 = vpop.permute.xlu0 %2410
        %2414 = vset.pattern.permute.xlu0 0
        %2415 = vperm.xlu0 %2414, %v2377
        %v2416 = vpop.permute.xlu0 %2415
        %2419 = vset.pattern.permute.xlu0 0
        %2420 = vperm.xlu0 %2419, %v2378
        %v2421 = vpop.permute.xlu0 %2420
        %2424 = vset.pattern.permute.xlu0 0
        %2425 = vperm.xlu0 %2424, %v2379
        %v2426 = vpop.permute.xlu0 %2425
        %2429 = vset.pattern.permute.xlu0 0
        %2430 = vperm.xlu0 %2429, %v2380
        %v2431 = vpop.permute.xlu0 %2430
        %2434 = vset.pattern.permute.xlu0 0
        %2435 = vperm.xlu0 %2434, %v2381
        %v2436 = vpop.permute.xlu0 %2435
        %2439 = vset.pattern.permute.xlu0 0
        %2440 = vperm.xlu0 %2439, %v2382
        %v2441 = vpop.permute.xlu0 %2440
        %2444 = vset.pattern.permute.xlu0 0
        %2445 = vperm.xlu0 %2444, %v2383
        %v2446 = vpop.permute.xlu0 %2445
        %2449 = vset.pattern.permute.xlu0 0
        %2450 = vperm.xlu0 %2449, %v2384
        %v2451 = vpop.permute.xlu0 %2450
        %2454 = vset.pattern.permute.xlu0 0
        %2455 = vperm.xlu0 %2454, %v2385
        %v2456 = vpop.permute.xlu0 %2455
        %2459 = vset.pattern.permute.xlu0 0
        %2460 = vperm.xlu0 %2459, %v2386
        %v2461 = vpop.permute.xlu0 %2460
        %2464 = vset.pattern.permute.xlu0 0
        %2465 = vperm.xlu0 %2464, %v2387
        %v2466 = vpop.permute.xlu0 %2465
        %v2484 = vunpack.c.l.b16 %v2339
        %v2485 = vunpack.c.l.b16 %v2340
        %v2486 = vunpack.c.l.b16 %v2341
        %v2487 = vunpack.c.l.b16 %v2342
        %v2488 = vunpack.c.l.b16 %v2343
        %v2489 = vunpack.c.l.b16 %v2344
        %v2490 = vunpack.c.l.b16 %v2345
        %v2491 = vunpack.c.l.b16 %v2346
        %v2492 = vunpack.c.l.b16 %v2347
        %v2493 = vunpack.c.l.b16 %v2348
        %v2494 = vunpack.c.l.b16 %v2349
        %v2495 = vunpack.c.l.b16 %v2350
        %v2496 = vunpack.c.l.b16 %v2351
        %v2497 = vunpack.c.l.b16 %v2352
        %v2498 = vunpack.c.l.b16 %v2353
        %v2499 = vunpack.c.l.b16 %v2354
        %v2500 = vpack.c.b16 %v2485, %v2484
        %v2501 = vpack.c.b16 %v2487, %v2486
        %v2502 = vpack.c.b16 %v2489, %v2488
        %v2503 = vpack.c.b16 %v2491, %v2490
        %v2504 = vpack.c.b16 %v2493, %v2492
        %v2505 = vpack.c.b16 %v2495, %v2494
        %v2506 = vpack.c.b16 %v2497, %v2496
        %v2507 = vpack.c.b16 %v2499, %v2498
        %2516 = vmatprep.subr.bf16.mxu0 0
        %2517 = vmatpush1.bf16.msra.mxu0 %v2330
        %2518 = vmatprep.subr.bf16.mxu0 0
        %2519 = vmatpush1.bf16.msra.mxu0 %v2331
        %2520 = vmatprep.subr.bf16.mxu0 0
        %2521 = vmatpush1.bf16.msra.mxu0 %v2332
        %2522 = vmatprep.subr.bf16.mxu0 0
        %2523 = vmatpush1.bf16.msra.mxu0 %v2333
        %2524 = vmatprep.subr.bf16.mxu0 0
        %2525 = vmatpush1.bf16.msra.mxu0 %v2334
        %2526 = vmatprep.subr.bf16.mxu0 0
        %2527 = vmatpush1.bf16.msra.mxu0 %v2335
        %2528 = vmatprep.subr.bf16.mxu0 0
        %2529 = vmatpush1.bf16.msra.mxu0 %v2336
        %2530 = vmatprep.subr.bf16.mxu0 0
        %2531 = vmatpush1.bf16.msra.mxu0 %v2337
        %2532 = vmatprep.subr.bf16.mxu0 0
        %2533 = vmatpush1.bf16.msra.mxu0 0
        %2534 = vmatprep.subr.bf16.mxu0 0
        %2535 = vmatpush1.bf16.msra.mxu0 0
        %2536 = vmatprep.subr.bf16.mxu0 0
        %2537 = vmatpush1.bf16.msra.mxu0 0
        %2538 = vmatprep.subr.bf16.mxu0 0
        %2539 = vmatpush1.bf16.msra.mxu0 0
        %2540 = vmatprep.subr.bf16.mxu0 0
        %2541 = vmatpush1.bf16.msra.mxu0 0
        %2542 = vmatprep.subr.bf16.mxu0 0
        %2543 = vmatpush1.bf16.msra.mxu0 0
        %2544 = vmatprep.subr.bf16.mxu0 0
        %2545 = vmatpush1.bf16.msra.mxu0 0
        %2546 = vmatprep.subr.bf16.mxu0 0
        %2547 = vmatpush1.bf16.msra.mxu0 0
        %2548 = vmatprep.mubr.bf16.mxu0 0
        %2549 = vmatmul.mubr.bf16.gmra.mrb[0].mxu0 %v2500
        %v2550 = vpop.f32.mrb[0].mxu0
        %v2551 = vadd.f32 %v2391, %v2550
        %v2552 = vpop.f32.mrb[0].mxu0
        %v2553 = vpop.f32.mrb[0].mxu0
        %v2554 = vadd.f32 %v2396, %v2553
        %v2555 = vpop.f32.mrb[0].mxu0
        %2556 = vmatprep.mubr.bf16.mxu0 0
        %2557 = vmatmul.mubr.bf16.gmra.mrb[0].mxu0 %v2501
        %v2558 = vpop.f32.mrb[0].mxu0
        %v2559 = vadd.f32 %v2401, %v2558
        %v2560 = vpop.f32.mrb[0].mxu0
        %v2561 = vpop.f32.mrb[0].mxu0
        %v2562 = vadd.f32 %v2406, %v2561
        %v2563 = vpop.f32.mrb[0].mxu0
        %2564 = vmatprep.mubr.bf16.mxu0 0
        %2565 = vmatmul.mubr.bf16.gmra.mrb[0].mxu0 %v2502
        %v2566 = vpop.f32.mrb[0].mxu0
        %v2567 = vadd.f32 %v2411, %v2566
        %v2568 = vpop.f32.mrb[0].mxu0
        %v2569 = vpop.f32.mrb[0].mxu0
        %v2570 = vadd.f32 %v2416, %v2569
        %v2571 = vpop.f32.mrb[0].mxu0
        %2572 = vmatprep.mubr.bf16.mxu0 0
        %2573 = vmatmul.mubr.bf16.gmra.mrb[0].mxu0 %v2503
        %v2574 = vpop.f32.mrb[0].mxu0
        %v2575 = vadd.f32 %v2421, %v2574
        %v2576 = vpop.f32.mrb[0].mxu0
        %v2577 = vpop.f32.mrb[0].mxu0
        %v2578 = vadd.f32 %v2426, %v2577
        %v2579 = vpop.f32.mrb[0].mxu0
        %2580 = vmatprep.mubr.bf16.mxu0 0
        %2581 = vmatmul.mubr.bf16.gmra.mrb[0].mxu0 %v2504
        %v2582 = vpop.f32.mrb[0].mxu0
        %v2583 = vadd.f32 %v2431, %v2582
        %v2584 = vpop.f32.mrb[0].mxu0
        %v2585 = vpop.f32.mrb[0].mxu0
        %v2586 = vadd.f32 %v2436, %v2585
        %v2587 = vpop.f32.mrb[0].mxu0
        %2588 = vmatprep.mubr.bf16.mxu0 0
        %2589 = vmatmul.mubr.bf16.gmra.mrb[0].mxu0 %v2505
        %v2590 = vpop.f32.mrb[0].mxu0
        %v2591 = vadd.f32 %v2441, %v2590
        %v2592 = vpop.f32.mrb[0].mxu0
        %v2593 = vpop.f32.mrb[0].mxu0
        %v2594 = vadd.f32 %v2446, %v2593
        %v2595 = vpop.f32.mrb[0].mxu0
        %2596 = vmatprep.mubr.bf16.mxu0 0
        %2597 = vmatmul.mubr.bf16.gmra.mrb[0].mxu0 %v2506
        %v2598 = vpop.f32.mrb[0].mxu0
        %v2599 = vadd.f32 %v2451, %v2598
        %v2600 = vpop.f32.mrb[0].mxu0
        %v2601 = vpop.f32.mrb[0].mxu0
        %v2602 = vadd.f32 %v2456, %v2601
        %v2603 = vpop.f32.mrb[0].mxu0
        %2604 = vmatprep.mubr.bf16.mxu0 0
        %2605 = vmatmul.mubr.bf16.gmra.mrb[0].mxu0 %v2507
        %v2606 = vpop.f32.mrb[0].mxu0
        %v2607 = vadd.f32 %v2461, %v2606
        %v2608 = vpop.f32.mrb[0].mxu0
        %v2609 = vpop.f32.mrb[0].mxu0
        %v2610 = vadd.f32 %v2466, %v2609
        %v2611 = vpop.f32.mrb[0].mxu0
        %2612 = vdwg.mxu0
        %v2613 = vmul.f32 %v2551, 0.2
        %v2614 = vmul.f32 %v2554, 0.2
        %v2615 = vmul.f32 %v2559, 0.2
        %v2616 = vmul.f32 %v2562, 0.2
        %v2617 = vmul.f32 %v2567, 0.2
        %v2618 = vmul.f32 %v2570, 0.2
        %v2619 = vmul.f32 %v2575, 0.2
        %v2620 = vmul.f32 %v2578, 0.2
        %v2621 = vmul.f32 %v2583, 0.2
        %v2622 = vmul.f32 %v2586, 0.2
        %v2623 = vmul.f32 %v2591, 0.2
        %v2624 = vmul.f32 %v2594, 0.2
        %v2625 = vmul.f32 %v2599, 0.2
        %v2626 = vmul.f32 %v2602, 0.2
        %v2627 = vmul.f32 %v2607, 0.2
        %v2628 = vmul.f32 %v2610, 0.2
        %v2629 = vmax.f32 %v2551, %v2613
        %v2630 = vmax.f32 %v2554, %v2614
        %v2631 = vmax.f32 %v2559, %v2615
        %v2632 = vmax.f32 %v2562, %v2616
        %v2633 = vmax.f32 %v2567, %v2617
        %v2634 = vmax.f32 %v2570, %v2618
        %v2635 = vmax.f32 %v2575, %v2619
        %v2636 = vmax.f32 %v2578, %v2620
        %v2637 = vmax.f32 %v2583, %v2621
        %v2638 = vmax.f32 %v2586, %v2622
        %v2639 = vmax.f32 %v2591, %v2623
        %v2640 = vmax.f32 %v2594, %v2624
        %v2641 = vmax.f32 %v2599, %v2625
        %v2642 = vmax.f32 %v2602, %v2626
        %v2643 = vmax.f32 %v2607, %v2627
        %v2644 = vmax.f32 %v2610, %v2628
        %v2645 = vpack.c.bf16 %v2630, %v2629
        %v2646 = vpack.c.bf16 %v2632, %v2631
        %v2647 = vpack.c.bf16 %v2634, %v2633
        %v2648 = vpack.c.bf16 %v2636, %v2635
        %v2649 = vpack.c.bf16 %v2638, %v2637
        %v2650 = vpack.c.bf16 %v2640, %v2639
        %v2651 = vpack.c.bf16 %v2642, %v2641
        %v2652 = vpack.c.bf16 %v2644, %v2643
        %v2653 = vld [vmem:[%s9] sm:$0x1]
        %v2654 = vld [vmem:[%s10] sm:$0x1]
        %v2655 = vunpack.c.l.bf16 %v2654
        %2657 = vset.pattern.permute.xlu0 0
        %2658 = vperm.xlu0 %2657, %v2655
        %v2659 = vpop.permute.xlu0 %2658
        %v2662 = vunpack.c.l.s4 269488144
        %v2663 = vunpack.c.0.s8 %v2662
        %v2664 = vlaneseq
        %v2665 = vshrl.u32 %v2664, 7
        %v2666 = vsub.s32 %v2663, %v2665
        %v2667 = vrot.slane %v2659, %v2666
        %2668 = vmatprep.subr.bf16.mxu0 0
        %2669 = vmatpush1.bf16.msra.mxu0 %v2645
        %2670 = vmatprep.subr.bf16.mxu0 0
        %2671 = vmatpush1.bf16.msra.mxu0 %v2646
        %2672 = vmatprep.subr.bf16.mxu0 0
        %2673 = vmatpush1.bf16.msra.mxu0 %v2647
        %2674 = vmatprep.subr.bf16.mxu0 0
        %2675 = vmatpush1.bf16.msra.mxu0 %v2648
        %2676 = vmatprep.subr.bf16.mxu0 0
        %2677 = vmatpush1.bf16.msra.mxu0 %v2649
        %2678 = vmatprep.subr.bf16.mxu0 0
        %2679 = vmatpush1.bf16.msra.mxu0 %v2650
        %2680 = vmatprep.subr.bf16.mxu0 0
        %2681 = vmatpush1.bf16.msra.mxu0 %v2651
        %2682 = vmatprep.subr.bf16.mxu0 0
        %2683 = vmatpush1.bf16.msra.mxu0 %v2652
        %2684 = vmatprep.subr.bf16.mxu0 0
        %2685 = vmatpush1.bf16.msra.mxu0 0
        %2686 = vmatprep.subr.bf16.mxu0 0
        %2687 = vmatpush1.bf16.msra.mxu0 0
        %2688 = vmatprep.subr.bf16.mxu0 0
        %2689 = vmatpush1.bf16.msra.mxu0 0
        %2690 = vmatprep.subr.bf16.mxu0 0
        %2691 = vmatpush1.bf16.msra.mxu0 0
        %2692 = vmatprep.subr.bf16.mxu0 0
        %2693 = vmatpush1.bf16.msra.mxu0 0
        %2694 = vmatprep.subr.bf16.mxu0 0
        %2695 = vmatpush1.bf16.msra.mxu0 0
        %2696 = vmatprep.subr.bf16.mxu0 0
        %2697 = vmatpush1.bf16.msra.mxu0 0
        %2698 = vmatprep.subr.bf16.mxu0 0
        %2699 = vmatpush1.bf16.msra.mxu0 0
        %2700 = vmatprep.mubr.bf16.mxu0 0
        %2701 = vmatmul.mubr.bf16.gmra.mrb[0].mxu0 %v2653
        %v2702 = vpop.f32.mrb[0].mxu0
        %v2703 = vadd.f32 %v2667, %v2702
        %v2704 = vpop.f32.mrb[0].mxu0
        %v2705 = vpop.f32.mrb[0].mxu0
        %v2706 = vpop.f32.mrb[0].mxu0
        %2707 = vdwg.mxu0
        %v2708 = vmul.f32 %v2703, %v2703
        %v2709 = vand.u32 2147483647, %v2703
        %vm2710 = vcmp.le.f32.partialorder %v2709, 0.7853982
        %vm2711 = vcmp.lt.s32.totalorder %v2703, 0
        %v2712 = vand.u32 %v2703, 2139095040
        %v2713 = vshrl.u32 %v2712, 23
        %v2714 = vsub.s32 %v2713, 127
        %v2715 = vand.u32 2147483647, %v2703
        %v2716 = vand.u32 %v2715, 8388607
        %v2717 = vor.u32 %v2716, 8388608
        %v2718 = vsub.s32 0, %v2717
        %v2719 = vadd.s32 %v2714, 1
        %vm2720 = vcmp.gt.s32.totalorder %v2719, 0
        %v2721 = vsel %vm2720, %v2719, 0
        %v2722 = vshrl.u32 %v2721, 5
        %v2723 = vand.u32 %v2721, 31
        %v2724 = vsub.s32 32, %v2723
        %v2725 = vshrl.u32 683565275, %v2724
        %v2726 = vshll.u32 683565275, %v2723
        %v2727 = vshrl.u32 2475754826, %v2724
        %v2728 = vor.u32 %v2726, %v2727
        %v2729 = vshll.u32 2475754826, %v2723
        %v2730 = vshrl.u32 2131351028, %v2724
        %v2731 = vor.u32 %v2729, %v2730
        %v2732 = vshll.u32 2131351028, %v2723
        %v2733 = vshrl.u32 2102212464, %v2724
        %v2734 = vor.u32 %v2732, %v2733
        %v2735 = vshll.u32 2102212464, %v2723
        %v2736 = vshrl.u32 920167782, %v2724
        %v2737 = vor.u32 %v2735, %v2736
        %v2738 = vshll.u32 920167782, %v2723
        %v2739 = vshrl.u32 1326507024, %v2724
        %v2740 = vor.u32 %v2738, %v2739
        %vm2741 = vcmp.lt.s32.totalorder %v2722, 1
        %vm2742 = vcmp.lt.s32.totalorder %v2722, 2
        %vm2743 = vcmp.lt.s32.totalorder %v2722, 3
        %vm2744 = vcmp.lt.s32.totalorder %v2722, 4
        %v2745 = vsel %vm2741, %v2725, %v2728
        %v2746 = vsel %vm2744, %v2734, 2102212464
        %v2747 = vsel %vm2743, %v2731, %v2746
        %v2748 = vsel %vm2742, %v2745, %v2747
        %v2749 = vsel %vm2741, %v2728, %v2731
        %v2750 = vsel %vm2744, %v2737, 920167782
        %v2751 = vsel %vm2743, %v2734, %v2750
        %v2752 = vsel %vm2742, %v2749, %v2751
        %v2753 = vsel %vm2741, %v2731, %v2734
        %v2754 = vsel %vm2744, %v2740, 1326507024
        %v2755 = vsel %vm2743, %v2737, %v2754
        %v2756 = vsel %vm2742, %v2753, %v2755
        %v2757 = vshll.u32 %v2717, 8
        %v2758 = vmul.u32.u64.compose %v2757, %v2756
        %v2759 = vextract.low.u32 %v2758
        %v2760 = vextract.high.u32 %v2758
        %v2761 = vmul.u32.u64.compose %v2757, %v2752
        %v2762 = vextract.low.u32 %v2761
        %v2763 = vextract.high.u32 %v2761
        %v2764 = vmul.u32 %v2757, %v2748
        %v2765 = vadd.s32 %v2760, %v2762
        %vm2766 = vc.u32 %v2760, %v2762
        %v2767 = vadd.s32 %v2763, 1
        %v2768 = vsel %vm2766, %v2767, %v2763
        %v2769 = vadd.s32 %v2764, %v2768
        %v2770 = vadd.s32 %v2769, 536870912
        %v2771 = vshrl.u32 %v2770, 30
        %v2772 = vshll.u32 %v2771, 30
        %v2773 = vsub.s32 %v2769, %v2772
        %vm2774 = vcmp.lt.s32.totalorder %v2773, 0
        %v2775 = vsub.s32 0, %v2773
        %v2776 = vsel %vm2774, %v2775, %v2773
        %v2777 = vclz %v2776
        %v2778 = vsub.s32 %v2777, 2
        %vm2779 = vcmp.gt.s32.totalorder 0, %v2778
        %v2780 = vsel %vm2779, 0, %v2778
        %v2781 = vsub.s32 32, %v2780
        %v2782 = vshll.u32 %v2773, %v2780
        %v2783 = vshrl.u32 %v2765, %v2781
        %v2784 = vor.u32 %v2782, %v2783
        %v2785 = vsub.s32 4294967266, %v2780
        %v2786 = vadd.s32 %v2785, 127
        %v2787 = vshll.u32 %v2786, 23
        %v2788 = vor.u32 4788187, %v2787
        %v2789 = vand.u32 2147483647, %v2788
        %v2791 = vcvt.s32.f32 %v2784
        %v2792 = vmul.f32 %v2791, %v2789
        %v2793 = vxor.u32 %v2792, 2147483648
        %v2794 = vsel %vm2711, %v2793, %v2792
        %v2795 = vsub.s32 4, %v2771
        %v2796 = vsel %vm2711, %v2795, %v2771
        %v2797 = vsel %vm2710, %v2703, %v2794
        %v2798 = vsel %vm2710, 0, %v2796
        %v2799 = vcosq.f32.pop %v2797
        %v2800 = vsinq.f32.pop %v2797
        %vm2801 = vweird.f32 %v2703
        %v2802 = vadd.s32 %v2798, 3
        %v2803 = vand.u32 %v2802, 3
        %vm2804 = vcmp.lt.s32.totalorder %v2803, 2
        %vm2805 = vcmp.eq.s32.totalorder %v2803, 0
        %v2806 = vxor.u32 %v2800, 2147483648
        %v2807 = vsel %vm2805, %v2799, %v2806
        %vm2808 = vcmp.eq.s32.totalorder %v2803, 2
        %v2809 = vxor.u32 %v2799, 2147483648
        %v2810 = vsel %vm2808, %v2809, %v2800
        %v2811 = vsel %vm2804, %v2807, %v2810
        %v2812 = vsel %vm2801, nan, %v2811
        %v2813 = vmul.f32 %v2812, 6.2831855
        %vm2814 = vcmask 1040384
        %v2815 = vsel %vm2814, %v2708, %v2813
        %2816 = vst [vmem:[%s380] sm:$0x3] %v2815
        %s2817 = sand.u32 %s269, 1
        %s2818 = scalar_lea.sflag [#allocation3], %s2817
        %s2819 = sand.u32 %s269, 1
        %s2820 = smul.addr %s2819, 2
        %s2821 = scalar_lea.vmem [#allocation2], %s2820
        // Predicated region
        $region65: #{tpu_custom_call.1} parent=63 // pred_check
          %p2822 = pneg %p279
        $region66: #{tpu_custom_call.1} parent=63 // pred_check_branch
          %2824 = sbr.rel (%p2822) target = $region68
        $region67: #{tpu_custom_call.1} parent=63 // pred_region
          %s2826 = ssub.s32 32, 32
          %2827 = vsyncadd %s2818, %s2826
          %s2828 = smul.addr %s25, 32
          %s2829 = scalar_lea.hbm %s11, %s2828
          %s2831 = sshll.u32 %s2821, 4
          %s2832 = int_to_ptr.vmem [resolvable:$true] %s2831
          %2834 = dma.vmem_to_hbm [thread:$0]  %s2832, 32, %s2829, %s2818
        $region68: #{tpu_custom_call.1} parent=63 // pred_fallthru
          _
      $region64: #{tpu_custom_call.1} parent=5 // pred_fallthru
        _
      %p2835 = scmp.le.s32.totalorder 2, %s20
      // Predicated region
      $region69: #{tpu_custom_call.1} parent=5 // pred_check
        %p2836 = pneg %p2835
      $region70: #{tpu_custom_call.1} parent=5 // pred_check_branch
        %2838 = sbr.rel (%p2836) target = $region72
      $region71: #{tpu_custom_call.1} parent=5 // pred_region
        %s2839 = ssub.s32 %s20, 2
        // Predicated region
        $region73: #{tpu_custom_call.1} parent=71 // pred_check
          %p2840 = pneg %p285
        $region74: #{tpu_custom_call.1} parent=71 // pred_check_branch
          %2842 = sbr.rel (%p2840) target = $region76
        $region75: #{tpu_custom_call.1} parent=71 // pred_region
          %s2843 = sand.u32 %s270, 1
          %s2844 = scalar_lea.sflag [#allocation3], %s2843
          %s2845 = sand.u32 %s270, 1
          %s2846 = smul.addr %s2845, 2
          %s2847 = scalar_lea.vmem [#allocation2], %s2846
          %2848 = dma.done %s2844, 32
        $region76: #{tpu_custom_call.1} parent=71 // pred_fallthru
          _
      $region72: #{tpu_custom_call.1} parent=5 // pred_fallthru
        _
    $region6: #{tpu_custom_call.1} parent=1 // loop_footer
      %s24 = sadd.s32 1, %s20
    $region7: #{tpu_custom_call.1} parent=1 // loop_footer_branch
      %19 = sbr.rel target = $region3
    $region8: #{tpu_custom_call.1} parent=1 // loop_exit
      _
    %2849 = vsyncpa [#allocation3], 1
    %s2850 = scalar_lea.sflag [#allocation3], 1
    %2851 = vsyncpa %s2850, 1

</llo_original>
